<compile_context>
chip_gen: v7x
topology: tpu7x:2x2x1
jax: 0.10.0
libtpu: 0.0.40
codegen_flags: <defaults>
</compile_context>

<pallas_src>
import functools

import jax
import jax.numpy as jnp
from jax.experimental import pallas as pl
from jax.experimental.pallas import tpu as pltpu

_VMEM_LIMIT = 64 * 1024 * 1024


# --------------------------- row-tiled matmul + bias ---------------------------

def _matmul_bias_kernel(x_ref, w_ref, b_ref, o_ref):
    acc = jnp.dot(x_ref[...], w_ref[...], preferred_element_type=jnp.float32)
    o_ref[...] = (acc + b_ref[...]).astype(o_ref.dtype)


def run_matmul_bias(x2d, w_t, bias, out_dtype=jnp.float32, block_rows=256):
    """x2d: (N, K), w_t: (K, M), bias: (1, M)  ->  (N, M) = x2d @ w_t + bias."""
    N, K = x2d.shape
    M = w_t.shape[1]
    bm = N if N <= block_rows else block_rows
    return pl.pallas_call(
        _matmul_bias_kernel,
        out_shape=jax.ShapeDtypeStruct((N, M), out_dtype),
        grid=(pl.cdiv(N, bm),),
        in_specs=[
            pl.BlockSpec((bm, K), lambda i: (i, 0)),
            pl.BlockSpec((K, M), lambda i: (0, 0)),   # weights resident (constant index_map)
            pl.BlockSpec((1, M), lambda i: (0, 0)),
        ],
        out_specs=pl.BlockSpec((bm, M), lambda i: (i, 0)),
        compiler_params=pltpu.CompilerParams(
            dimension_semantics=("parallel",),
            vmem_limit_bytes=_VMEM_LIMIT,
        ),
    )(x2d, w_t, bias)


# ----------------------------- LSTM recurrence kernel -----------------------------

def _lstm_recurrence_kernel(gx_ref, whh_ref, out_ref, h_sc, c_sc):
    """One grid step processes a block of Tc time steps.

    gx_ref:  (B, Tc, 4H) f32   precomputed x @ W_ih^T + (b_ih + b_hh) for this time block
    whh_ref: (H, 4H)     bf16  hidden-to-hidden weights (pre-transposed, gate order i,f,o,g)
    out_ref: (B, Tc, H)  bf16  hidden states for this time block
    h_sc, c_sc: (B, H)   f32   recurrent state carried across grid steps (VMEM scratch)
    """
    @pl.when(pl.program_id(0) == 0)
    def _():
        h_sc[...] = jnp.zeros_like(h_sc)
        c_sc[...] = jnp.zeros_like(c_sc)

    H = h_sc.shape[1]
    Tc = gx_ref.shape[1]
    whh = whh_ref[...]
    h = h_sc[...]
    c = c_sc[...]

    # Statically-unrolled loop over the time block (Tc is small & static): static slices only.
    for s in range(Tc):
        gates = gx_ref[:, s, :] + jnp.dot(
            h.astype(whh.dtype), whh, preferred_element_type=jnp.float32)
        # Gate order after offline reorder: i, f, o, g.
        # One sigmoid over the contiguous 3H lanes, one tanh over the last H lanes.
        ifo = jax.nn.sigmoid(gates[:, :3 * H])
        g_g = jnp.tanh(gates[:, 3 * H:])
        i_g = ifo[:, 0 * H:1 * H]
        f_g = ifo[:, 1 * H:2 * H]
        o_g = ifo[:, 2 * H:3 * H]
        c = f_g * c + i_g * g_g
        h = o_g * jnp.tanh(c)
        out_ref[:, s, :] = h.astype(out_ref.dtype)

    h_sc[...] = h
    c_sc[...] = c


def _pick_time_block(T, max_tc=16):
    """Pick a time-block size that satisfies the (8,128) block constraints."""
    if T <= max_tc:
        return T
    for tc in (16, 8):
        if T % tc == 0:
            return tc
    return T


def run_lstm_layer(gates_x, whh_t_bf16, hidden_size):
    """gates_x: (B, T, 4H) f32 precomputed input projection.  Returns (B, T, H) bf16."""
    B, T, G = gates_x.shape
    H = hidden_size
    Tc = _pick_time_block(T)
    return pl.pallas_call(
        _lstm_recurrence_kernel,
        out_shape=jax.ShapeDtypeStruct((B, T, H), jnp.bfloat16),
        grid=(T // Tc,),
        in_specs=[
            pl.BlockSpec((B, Tc, G), lambda t: (0, t, 0)),
            pl.BlockSpec((H, G), lambda t: (0, 0)),   # weights resident (constant index_map)
        ],
        out_specs=pl.BlockSpec((B, Tc, H), lambda t: (0, t, 0)),
        scratch_shapes=[
            pltpu.VMEM((B, H), jnp.float32),  # h
            pltpu.VMEM((B, H), jnp.float32),  # c
        ],
        compiler_params=pltpu.CompilerParams(
            dimension_semantics=("arbitrary",),  # recurrence over time is sequential
            vmem_limit_bytes=_VMEM_LIMIT,
        ),
    )(gates_x, whh_t_bf16)


# -------------------------------- params & prep --------------------------------

def _round_up(x, m):
    return (x + m - 1) // m * m


def init_params(key, input_size, hidden_size, num_layers, class_size):
    """PyTorch-style U(-1/sqrt(H), 1/sqrt(H)) init, PyTorch gate order (i, f, g, o)."""
    params = {"layers": []}
    bound = 1.0 / jnp.sqrt(jnp.float32(hidden_size))
    for l in range(num_layers):
        d_in = input_size if l == 0 else hidden_size
        key, k1, k2, k3, k4 = jax.random.split(key, 5)
        wih = jax.random.uniform(k1, (4 * hidden_size, d_in), jnp.float32, -bound, bound)
        whh = jax.random.uniform(k2, (4 * hidden_size, hidden_size), jnp.float32, -bound, bound)
        bih = jax.random.uniform(k3, (4 * hidden_size,), jnp.float32, -bound, bound)
        bhh = jax.random.uniform(k4, (4 * hidden_size,), jnp.float32, -bound, bound)
        params["layers"].append({"wih": wih, "whh": whh, "bih": bih, "bhh": bhh})
    key, k1, k2 = jax.random.split(key, 3)
    w_out = jax.random.uniform(k1, (class_size, hidden_size), jnp.float32, -bound, bound)
    b_out = jax.random.uniform(k2, (class_size,), jnp.float32, -bound, bound)
    params["w_out"] = w_out
    params["b_out"] = b_out
    return params


def _reorder_gates_ifog(w4h):
    """Reorder PyTorch gate blocks (i, f, g, o) -> (i, f, o, g) along axis 0."""
    H = w4h.shape[0] // 4
    return jnp.concatenate([w4h[:2 * H], w4h[3 * H:], w4h[2 * H:3 * H]], axis=0)


def prepare_kernel_params(params, hidden_size, class_size):
    """One-time weight prep: gate reorder, transpose, bf16 cast, output-class padding."""
    H = hidden_size
    kp = {"layers": []}
    for layer in params["layers"]:
        wih_r = _reorder_gates_ifog(layer["wih"])                 # (4H, D_in)
        whh_r = _reorder_gates_ifog(layer["whh"])                 # (4H, H)
        b_r = _reorder_gates_ifog(layer["bih"] + layer["bhh"])    # (4H,)
        kp["layers"].append({
            "wih_t": wih_r.T.astype(jnp.bfloat16),                # (D_in, 4H)
            "whh_t": whh_r.T.astype(jnp.bfloat16),                # (H, 4H)
            "b": b_r.reshape(1, 4 * H).astype(jnp.float32),       # (1, 4H)
        })
    C = class_size
    Cp = _round_up(C, 128)
    kp["w_out_t"] = jnp.pad(params["w_out"].T, ((0, 0), (0, Cp - C))).astype(jnp.bfloat16)
    kp["b_out"] = jnp.pad(params["b_out"].reshape(1, -1), ((0, 0), (0, Cp - C))).astype(jnp.float32)
    return kp


# ------------------------------------ forward ------------------------------------

@functools.partial(jax.jit, static_argnames=("class_size",))
def lstm_forward(x, kparams, *, class_size):
    """x: (B, T, input_size) f32 -> (B, T, class_size) f32.  Batch-first throughout."""
    B, T, _ = x.shape
    H = kparams["layers"][0]["whh_t"].shape[0]

    seq = x.astype(jnp.bfloat16)
    for layer in kparams["layers"]:
        D_in = layer["wih_t"].shape[0]
        # Hoisted input projection: one big (B*T, D_in) @ (D_in, 4H) bf16 MXU matmul, f32 accum.
        gates_x = run_matmul_bias(
            seq.reshape(B * T, D_in),
            layer["wih_t"],
            layer["b"],
            out_dtype=jnp.float32,
        ).reshape(B, T, 4 * H)
        # Sequential part: only h @ W_hh per time step, time axis blocked.
        seq = run_lstm_layer(gates_x, layer["whh_t"], H)

    # Dropout is identity in eval mode.
    # Final Linear: class dim pre-padded to a lane-dense multiple of 128 (sliced after).
    Cp = kparams["w_out_t"].shape[1]
    y = run_matmul_bias(seq.reshape(B * T, H), kparams["w_out_t"], kparams["b_out"],
                        out_dtype=jnp.float32)
    return y.reshape(B, T, Cp)[:, :, :class_size]


# ------------------------------ Pure-JAX f32 reference ------------------------------

def lstm_reference(x, params):
    B = x.shape[0]
    seq = jnp.transpose(x, (1, 0, 2))  # (T, B, D) for scan
    for layer in params["layers"]:
        H = layer["whh"].shape[1]
        wih_t = layer["wih"].T
        whh_t = layer["whh"].T
        b = (layer["bih"] + layer["bhh"]).reshape(1, -1)

        def step(carry, x_t, wih_t=wih_t, whh_t=whh_t, b=b, H=H):
            h, c = carry
            g = x_t @ wih_t + h @ whh_t + b
            i = jax.nn.sigmoid(g[:, :H])
            f = jax.nn.sigmoid(g[:, H:2 * H])
            gg = jnp.tanh(g[:, 2 * H:3 * H])
            o = jax.nn.sigmoid(g[:, 3 * H:])
            c = f * c + i * gg
            h = o * jnp.tanh(c)
            return (h, c), h

        init = (jnp.zeros((B, H), jnp.float32), jnp.zeros((B, H), jnp.float32))
        _, seq = jax.lax.scan(step, init, seq)
    y = seq @ params["w_out"].T + params["b_out"].reshape(1, -1)  # (T, B, C)
    return jnp.transpose(y, (1, 0, 2))


# ------------------------------------- Main ---------------------------------------

if __name__ == "__main__":
    B, T = 2, 8
    input_size, hidden_size, num_layers, class_size = 16, 32, 2, 8

    key = jax.random.PRNGKey(0)
    key, kx, kp = jax.random.split(key, 3)
    x = jax.random.normal(kx, (B, T, input_size), jnp.float32)
    params = init_params(kp, input_size, hidden_size, num_layers, class_size)
    kparams = prepare_kernel_params(params, hidden_size, class_size)

    out = jax.block_until_ready(lstm_forward(x, kparams, class_size=class_size))
    ref = lstm_reference(x, params)

    assert out.shape == (B, T, class_size), out.shape
    max_err = float(jnp.max(jnp.abs(out - ref)))
    # bf16 matmul operands (f32 accumulation) -> relaxed tolerance vs. the pure-f32 reference.
    assert jnp.allclose(out, ref, atol=3e-2, rtol=3e-2), max_err

    print("KERNEL_OK")
</pallas_src>

<mosaic_0001>
module attributes {stable_mosaic.version = 11 : i64} {
  func.func @_matmul_bias_kernel(%arg0: i32, %arg1: memref<16x32xbf16, #tpu.memory_space<vmem>>, %arg2: memref<32x128xbf16, #tpu.memory_space<vmem>>, %arg3: memref<1x128xf32, #tpu.memory_space<vmem>>, %arg4: memref<16x128xf32, #tpu.memory_space<vmem>>) attributes {dimension_semantics = [#tpu.dimension_semantics<parallel>], iteration_bounds = array<i64: 1>, scalar_prefetch = 0 : i64, scratch_operands = 0 : i64, tpu.core_type = #tpu.core_type<tc>, window_params = [{transform_indices = @transform_0, window_bounds = array<i64: 16, 32>}, {pipeline_mode = #tpu.pipeline_mode<synchronous>, transform_indices = @transform_1, window_bounds = array<i64: 32, 128>}, {pipeline_mode = #tpu.pipeline_mode<synchronous>, transform_indices = @transform_2, window_bounds = array<i64: 1, 128>}, {transform_indices = @transform_3, window_bounds = array<i64: 16, 128>}]} {
    %c0 = arith.constant 0 : index
    %c0_0 = arith.constant 0 : index
    %0 = vector.load %arg1[%c0, %c0_0] : memref<16x32xbf16, #tpu.memory_space<vmem>>, vector<16x32xbf16>
    %c0_1 = arith.constant 0 : index
    %c0_2 = arith.constant 0 : index
    %1 = vector.load %arg2[%c0_1, %c0_2] : memref<32x128xbf16, #tpu.memory_space<vmem>>, vector<32x128xbf16>
    %cst = arith.constant dense<0.000000e+00> : vector<16x128xf32>
    %2 = tpu.matmul %0, %1, %cst {dimension_numbers = #tpu.dot_dimension_numbers<[1], [0], [0], [1], [0, 0, 1, 1], [], []>} : vector<16x32xbf16>, vector<32x128xbf16>, vector<16x128xf32> -> vector<16x128xf32>
    %c0_3 = arith.constant 0 : index
    %c0_4 = arith.constant 0 : index
    %3 = vector.load %arg3[%c0_3, %c0_4] : memref<1x128xf32, #tpu.memory_space<vmem>>, vector<1x128xf32>
    %4 = vector.broadcast %3 : vector<1x128xf32> to vector<16x128xf32>
    %5 = arith.addf %2, %4 : vector<16x128xf32>
    %c0_5 = arith.constant 0 : index
    %c0_6 = arith.constant 0 : index
    %6 = vector.load %arg4[%c0_5, %c0_6] : memref<16x128xf32, #tpu.memory_space<vmem>>, vector<16x128xf32>
    tpu.vector_store %arg4[%c0_5, %c0_6], %5 {strides = array<i32>} : memref<16x128xf32, #tpu.memory_space<vmem>>, vector<16x128xf32>,
    return
  }
  func.func @transform_0(%arg0: i32) -> (i32, i32) {
    %c0_i32 = arith.constant 0 : i32
    %c0_i32_0 = arith.constant 0 : i32
    return %arg0, %c0_i32 : i32, i32
  }
  func.func @transform_1(%arg0: i32) -> (i32, i32) {
    %c0_i32 = arith.constant 0 : i32
    %c0_i32_0 = arith.constant 0 : i32
    %c0_i32_1 = arith.constant 0 : i32
    return %c0_i32, %c0_i32_0 : i32, i32
  }
  func.func @transform_2(%arg0: i32) -> (i32, i32) {
    %c0_i32 = arith.constant 0 : i32
    %c0_i32_0 = arith.constant 0 : i32
    %c0_i32_1 = arith.constant 0 : i32
    return %c0_i32, %c0_i32_0 : i32, i32
  }
  func.func @transform_3(%arg0: i32) -> (i32, i32) {
    %c0_i32 = arith.constant 0 : i32
    %c0_i32_0 = arith.constant 0 : i32
    return %arg0, %c0_i32 : i32, i32
  }
}

module attributes {stable_mosaic.version = 11 : i64} {
  func.func @_lstm_recurrence_kernel(%arg0: i32, %arg1: memref<2x8x128xf32, #tpu.memory_space<vmem>>, %arg2: memref<32x128xbf16, #tpu.memory_space<vmem>>, %arg3: memref<2x8x32xbf16, #tpu.memory_space<vmem>>, %arg4: memref<2x32xf32, #tpu.memory_space<vmem>>, %arg5: memref<2x32xf32, #tpu.memory_space<vmem>>) attributes {dimension_semantics = [#tpu.dimension_semantics<arbitrary>], iteration_bounds = array<i64: 1>, scalar_prefetch = 0 : i64, scratch_operands = 2 : i64, tpu.core_type = #tpu.core_type<tc>, window_params = [{transform_indices = @transform_0, window_bounds = array<i64: 2, 8, 128>}, {pipeline_mode = #tpu.pipeline_mode<synchronous>, transform_indices = @transform_1, window_bounds = array<i64: 32, 128>}, {transform_indices = @transform_2, window_bounds = array<i64: 2, 8, 32>}]} {
    %c0_i32 = arith.constant 0 : i32
    %0 = arith.cmpi eq, %arg0, %c0_i32 : i32
    %1 = arith.extui %0 : i1 to i32
    %c0_i32_0 = arith.constant 0 : i32
    %2 = arith.cmpi ne, %1, %c0_i32_0 : i32
    scf.if %2 {
      %cst_66 = arith.constant 0.000000e+00 : f32
      %208 = vector.broadcast %cst_66 : f32 to vector<2x32xf32>
      %c0_67 = arith.constant 0 : index
      %c0_68 = arith.constant 0 : index
      %209 = vector.load %arg4[%c0_67, %c0_68] : memref<2x32xf32, #tpu.memory_space<vmem>>, vector<2x32xf32>
      tpu.vector_store %arg4[%c0_67, %c0_68], %208 {strides = array<i32>} : memref<2x32xf32, #tpu.memory_space<vmem>>, vector<2x32xf32>,
      %cst_69 = arith.constant 0.000000e+00 : f32
      %210 = vector.broadcast %cst_69 : f32 to vector<2x32xf32>
      %c0_70 = arith.constant 0 : index
      %c0_71 = arith.constant 0 : index
      %211 = vector.load %arg5[%c0_70, %c0_71] : memref<2x32xf32, #tpu.memory_space<vmem>>, vector<2x32xf32>
      tpu.vector_store %arg5[%c0_70, %c0_71], %210 {strides = array<i32>} : memref<2x32xf32, #tpu.memory_space<vmem>>, vector<2x32xf32>,
    } else {
    }
    %c0 = arith.constant 0 : index
    %c0_1 = arith.constant 0 : index
    %3 = vector.load %arg2[%c0, %c0_1] : memref<32x128xbf16, #tpu.memory_space<vmem>>, vector<32x128xbf16>
    %c0_2 = arith.constant 0 : index
    %c0_3 = arith.constant 0 : index
    %4 = vector.load %arg4[%c0_2, %c0_3] : memref<2x32xf32, #tpu.memory_space<vmem>>, vector<2x32xf32>
    %c0_4 = arith.constant 0 : index
    %c0_5 = arith.constant 0 : index
    %5 = vector.load %arg5[%c0_4, %c0_5] : memref<2x32xf32, #tpu.memory_space<vmem>>, vector<2x32xf32>
    %c0_6 = arith.constant 0 : index
    %c0_7 = arith.constant 0 : index
    %c0_8 = arith.constant 0 : index
    %6 = vector.load %arg1[%c0_6, %c0_7, %c0_8] : memref<2x8x128xf32, #tpu.memory_space<vmem>>, vector<2x1x128xf32>
    %7 = vector.shape_cast %6 : vector<2x1x128xf32> to vector<2x128xf32>
    %8 = arith.truncf %4 : vector<2x32xf32> to vector<2x32xbf16>
    %cst = arith.constant dense<0.000000e+00> : vector<2x128xf32>
    %9 = tpu.matmul %8, %3, %cst {dimension_numbers = #tpu.dot_dimension_numbers<[1], [0], [0], [1], [0, 0, 1, 1], [], []>} : vector<2x32xbf16>, vector<32x128xbf16>, vector<2x128xf32> -> vector<2x128xf32>
    %10 = arith.addf %7, %9 : vector<2x128xf32>
    %11 = vector.extract_strided_slice %10 {offsets = [0, 0], sizes = [2, 96], strides = [1, 1]} : vector<2x128xf32> to vector<2x96xf32>
    %12 = arith.negf %11 : vector<2x96xf32>
    %13 = math.exp %12 : vector<2x96xf32>
    %cst_9 = arith.constant 1.000000e+00 : f32
    %14 = vector.broadcast %cst_9 : f32 to vector<2x96xf32>
    %15 = arith.addf %14, %13 : vector<2x96xf32>
    %16 = arith.divf %14, %15 : vector<2x96xf32>
    %17 = vector.extract_strided_slice %10 {offsets = [0, 96], sizes = [2, 32], strides = [1, 1]} : vector<2x128xf32> to vector<2x32xf32>
    %18 = math.tanh %17 : vector<2x32xf32>
    %19 = vector.extract_strided_slice %16 {offsets = [0, 0], sizes = [2, 32], strides = [1, 1]} : vector<2x96xf32> to vector<2x32xf32>
    %20 = vector.extract_strided_slice %16 {offsets = [0, 32], sizes = [2, 32], strides = [1, 1]} : vector<2x96xf32> to vector<2x32xf32>
    %21 = vector.extract_strided_slice %16 {offsets = [0, 64], sizes = [2, 32], strides = [1, 1]} : vector<2x96xf32> to vector<2x32xf32>
    %22 = arith.mulf %20, %5 : vector<2x32xf32>
    %23 = arith.mulf %19, %18 : vector<2x32xf32>
    %24 = arith.addf %22, %23 : vector<2x32xf32>
    %25 = math.tanh %24 : vector<2x32xf32>
    %26 = arith.mulf %21, %25 : vector<2x32xf32>
    %27 = arith.truncf %26 : vector<2x32xf32> to vector<2x32xbf16>
    %c0_10 = arith.constant 0 : index
    %c0_11 = arith.constant 0 : index
    %c0_12 = arith.constant 0 : index
    %28 = vector.load %arg3[%c0_10, %c0_11, %c0_12] : memref<2x8x32xbf16, #tpu.memory_space<vmem>>, vector<2x1x32xbf16>
    %29 = vector.shape_cast %28 : vector<2x1x32xbf16> to vector<2x32xbf16>
    %30 = vector.shape_cast %27 : vector<2x32xbf16> to vector<2x1x32xbf16>
    tpu.vector_store %arg3[%c0_10, %c0_11, %c0_12], %30 {strides = array<i32>} : memref<2x8x32xbf16, #tpu.memory_space<vmem>>, vector<2x1x32xbf16>,
    %c0_13 = arith.constant 0 : index
    %c1 = arith.constant 1 : index
    %c0_14 = arith.constant 0 : index
    %31 = vector.load %arg1[%c0_13, %c1, %c0_14] : memref<2x8x128xf32, #tpu.memory_space<vmem>>, vector<2x1x128xf32>
    %32 = vector.shape_cast %31 : vector<2x1x128xf32> to vector<2x128xf32>
    %33 = arith.truncf %26 : vector<2x32xf32> to vector<2x32xbf16>
    %cst_15 = arith.constant dense<0.000000e+00> : vector<2x128xf32>
    %34 = tpu.matmul %33, %3, %cst_15 {dimension_numbers = #tpu.dot_dimension_numbers<[1], [0], [0], [1], [0, 0, 1, 1], [], []>} : vector<2x32xbf16>, vector<32x128xbf16>, vector<2x128xf32> -> vector<2x128xf32>
    %35 = arith.addf %32, %34 : vector<2x128xf32>
    %36 = vector.extract_strided_slice %35 {offsets = [0, 0], sizes = [2, 96], strides = [1, 1]} : vector<2x128xf32> to vector<2x96xf32>
    %37 = arith.negf %36 : vector<2x96xf32>
    %38 = math.exp %37 : vector<2x96xf32>
    %cst_16 = arith.constant 1.000000e+00 : f32
    %39 = vector.broadcast %cst_16 : f32 to vector<2x96xf32>
    %40 = arith.addf %39, %38 : vector<2x96xf32>
    %41 = arith.divf %39, %40 : vector<2x96xf32>
    %42 = vector.extract_strided_slice %35 {offsets = [0, 96], sizes = [2, 32], strides = [1, 1]} : vector<2x128xf32> to vector<2x32xf32>
    %43 = math.tanh %42 : vector<2x32xf32>
    %44 = vector.extract_strided_slice %41 {offsets = [0, 0], sizes = [2, 32], strides = [1, 1]} : vector<2x96xf32> to vector<2x32xf32>
    %45 = vector.extract_strided_slice %41 {offsets = [0, 32], sizes = [2, 32], strides = [1, 1]} : vector<2x96xf32> to vector<2x32xf32>
    %46 = vector.extract_strided_slice %41 {offsets = [0, 64], sizes = [2, 32], strides = [1, 1]} : vector<2x96xf32> to vector<2x32xf32>
    %47 = arith.mulf %45, %24 : vector<2x32xf32>
    %48 = arith.mulf %44, %43 : vector<2x32xf32>
    %49 = arith.addf %47, %48 : vector<2x32xf32>
    %50 = math.tanh %49 : vector<2x32xf32>
    %51 = arith.mulf %46, %50 : vector<2x32xf32>
    %52 = arith.truncf %51 : vector<2x32xf32> to vector<2x32xbf16>
    %c0_17 = arith.constant 0 : index
    %c1_18 = arith.constant 1 : index
    %c0_19 = arith.constant 0 : index
    %53 = vector.load %arg3[%c0_17, %c1_18, %c0_19] : memref<2x8x32xbf16, #tpu.memory_space<vmem>>, vector<2x1x32xbf16>
    %54 = vector.shape_cast %53 : vector<2x1x32xbf16> to vector<2x32xbf16>
    %55 = vector.shape_cast %52 : vector<2x32xbf16> to vector<2x1x32xbf16>
    tpu.vector_store %arg3[%c0_17, %c1_18, %c0_19], %55 {strides = array<i32>} : memref<2x8x32xbf16, #tpu.memory_space<vmem>>, vector<2x1x32xbf16>,
    %c0_20 = arith.constant 0 : index
    %c2 = arith.constant 2 : index
    %c0_21 = arith.constant 0 : index
    %56 = vector.load %arg1[%c0_20, %c2, %c0_21] : memref<2x8x128xf32, #tpu.memory_space<vmem>>, vector<2x1x128xf32>
    %57 = vector.shape_cast %56 : vector<2x1x128xf32> to vector<2x128xf32>
    %58 = arith.truncf %51 : vector<2x32xf32> to vector<2x32xbf16>
    %cst_22 = arith.constant dense<0.000000e+00> : vector<2x128xf32>
    %59 = tpu.matmul %58, %3, %cst_22 {dimension_numbers = #tpu.dot_dimension_numbers<[1], [0], [0], [1], [0, 0, 1, 1], [], []>} : vector<2x32xbf16>, vector<32x128xbf16>, vector<2x128xf32> -> vector<2x128xf32>
    %60 = arith.addf %57, %59 : vector<2x128xf32>
    %61 = vector.extract_strided_slice %60 {offsets = [0, 0], sizes = [2, 96], strides = [1, 1]} : vector<2x128xf32> to vector<2x96xf32>
    %62 = arith.negf %61 : vector<2x96xf32>
    %63 = math.exp %62 : vector<2x96xf32>
    %cst_23 = arith.constant 1.000000e+00 : f32
    %64 = vector.broadcast %cst_23 : f32 to vector<2x96xf32>
    %65 = arith.addf %64, %63 : vector<2x96xf32>
    %66 = arith.divf %64, %65 : vector<2x96xf32>
    %67 = vector.extract_strided_slice %60 {offsets = [0, 96], sizes = [2, 32], strides = [1, 1]} : vector<2x128xf32> to vector<2x32xf32>
    %68 = math.tanh %67 : vector<2x32xf32>
    %69 = vector.extract_strided_slice %66 {offsets = [0, 0], sizes = [2, 32], strides = [1, 1]} : vector<2x96xf32> to vector<2x32xf32>
    %70 = vector.extract_strided_slice %66 {offsets = [0, 32], sizes = [2, 32], strides = [1, 1]} : vector<2x96xf32> to vector<2x32xf32>
    %71 = vector.extract_strided_slice %66 {offsets = [0, 64], sizes = [2, 32], strides = [1, 1]} : vector<2x96xf32> to vector<2x32xf32>
    %72 = arith.mulf %70, %49 : vector<2x32xf32>
    %73 = arith.mulf %69, %68 : vector<2x32xf32>
    %74 = arith.addf %72, %73 : vector<2x32xf32>
    %75 = math.tanh %74 : vector<2x32xf32>
    %76 = arith.mulf %71, %75 : vector<2x32xf32>
    %77 = arith.truncf %76 : vector<2x32xf32> to vector<2x32xbf16>
    %c0_24 = arith.constant 0 : index
    %c2_25 = arith.constant 2 : index
    %c0_26 = arith.constant 0 : index
    %78 = vector.load %arg3[%c0_24, %c2_25, %c0_26] : memref<2x8x32xbf16, #tpu.memory_space<vmem>>, vector<2x1x32xbf16>
    %79 = vector.shape_cast %78 : vector<2x1x32xbf16> to vector<2x32xbf16>
    %80 = vector.shape_cast %77 : vector<2x32xbf16> to vector<2x1x32xbf16>
    tpu.vector_store %arg3[%c0_24, %c2_25, %c0_26], %80 {strides = array<i32>} : memref<2x8x32xbf16, #tpu.memory_space<vmem>>, vector<2x1x32xbf16>,
    %c0_27 = arith.constant 0 : index
    %c3 = arith.constant 3 : index
    %c0_28 = arith.constant 0 : index
    %81 = vector.load %arg1[%c0_27, %c3, %c0_28] : memref<2x8x128xf32, #tpu.memory_space<vmem>>, vector<2x1x128xf32>
    %82 = vector.shape_cast %81 : vector<2x1x128xf32> to vector<2x128xf32>
    %83 = arith.truncf %76 : vector<2x32xf32> to vector<2x32xbf16>
    %cst_29 = arith.constant dense<0.000000e+00> : vector<2x128xf32>
    %84 = tpu.matmul %83, %3, %cst_29 {dimension_numbers = #tpu.dot_dimension_numbers<[1], [0], [0], [1], [0, 0, 1, 1], [], []>} : vector<2x32xbf16>, vector<32x128xbf16>, vector<2x128xf32> -> vector<2x128xf32>
    %85 = arith.addf %82, %84 : vector<2x128xf32>
    %86 = vector.extract_strided_slice %85 {offsets = [0, 0], sizes = [2, 96], strides = [1, 1]} : vector<2x128xf32> to vector<2x96xf32>
    %87 = arith.negf %86 : vector<2x96xf32>
    %88 = math.exp %87 : vector<2x96xf32>
    %cst_30 = arith.constant 1.000000e+00 : f32
    %89 = vector.broadcast %cst_30 : f32 to vector<2x96xf32>
    %90 = arith.addf %89, %88 : vector<2x96xf32>
    %91 = arith.divf %89, %90 : vector<2x96xf32>
    %92 = vector.extract_strided_slice %85 {offsets = [0, 96], sizes = [2, 32], strides = [1, 1]} : vector<2x128xf32> to vector<2x32xf32>
    %93 = math.tanh %92 : vector<2x32xf32>
    %94 = vector.extract_strided_slice %91 {offsets = [0, 0], sizes = [2, 32], strides = [1, 1]} : vector<2x96xf32> to vector<2x32xf32>
    %95 = vector.extract_strided_slice %91 {offsets = [0, 32], sizes = [2, 32], strides = [1, 1]} : vector<2x96xf32> to vector<2x32xf32>
    %96 = vector.extract_strided_slice %91 {offsets = [0, 64], sizes = [2, 32], strides = [1, 1]} : vector<2x96xf32> to vector<2x32xf32>
    %97 = arith.mulf %95, %74 : vector<2x32xf32>
    %98 = arith.mulf %94, %93 : vector<2x32xf32>
    %99 = arith.addf %97, %98 : vector<2x32xf32>
    %100 = math.tanh %99 : vector<2x32xf32>
    %101 = arith.mulf %96, %100 : vector<2x32xf32>
    %102 = arith.truncf %101 : vector<2x32xf32> to vector<2x32xbf16>
    %c0_31 = arith.constant 0 : index
    %c3_32 = arith.constant 3 : index
    %c0_33 = arith.constant 0 : index
    %103 = vector.load %arg3[%c0_31, %c3_32, %c0_33] : memref<2x8x32xbf16, #tpu.memory_space<vmem>>, vector<2x1x32xbf16>
    %104 = vector.shape_cast %103 : vector<2x1x32xbf16> to vector<2x32xbf16>
    %105 = vector.shape_cast %102 : vector<2x32xbf16> to vector<2x1x32xbf16>
    tpu.vector_store %arg3[%c0_31, %c3_32, %c0_33], %105 {strides = array<i32>} : memref<2x8x32xbf16, #tpu.memory_space<vmem>>, vector<2x1x32xbf16>,
    %c0_34 = arith.constant 0 : index
    %c4 = arith.constant 4 : index
    %c0_35 = arith.constant 0 : index
    %106 = vector.load %arg1[%c0_34, %c4, %c0_35] : memref<2x8x128xf32, #tpu.memory_space<vmem>>, vector<2x1x128xf32>
    %107 = vector.shape_cast %106 : vector<2x1x128xf32> to vector<2x128xf32>
    %108 = arith.truncf %101 : vector<2x32xf32> to vector<2x32xbf16>
    %cst_36 = arith.constant dense<0.000000e+00> : vector<2x128xf32>
    %109 = tpu.matmul %108, %3, %cst_36 {dimension_numbers = #tpu.dot_dimension_numbers<[1], [0], [0], [1], [0, 0, 1, 1], [], []>} : vector<2x32xbf16>, vector<32x128xbf16>, vector<2x128xf32> -> vector<2x128xf32>
    %110 = arith.addf %107, %109 : vector<2x128xf32>
    %111 = vector.extract_strided_slice %110 {offsets = [0, 0], sizes = [2, 96], strides = [1, 1]} : vector<2x128xf32> to vector<2x96xf32>
    %112 = arith.negf %111 : vector<2x96xf32>
    %113 = math.exp %112 : vector<2x96xf32>
    %cst_37 = arith.constant 1.000000e+00 : f32
    %114 = vector.broadcast %cst_37 : f32 to vector<2x96xf32>
    %115 = arith.addf %114, %113 : vector<2x96xf32>
    %116 = arith.divf %114, %115 : vector<2x96xf32>
    %117 = vector.extract_strided_slice %110 {offsets = [0, 96], sizes = [2, 32], strides = [1, 1]} : vector<2x128xf32> to vector<2x32xf32>
    %118 = math.tanh %117 : vector<2x32xf32>
    %119 = vector.extract_strided_slice %116 {offsets = [0, 0], sizes = [2, 32], strides = [1, 1]} : vector<2x96xf32> to vector<2x32xf32>
    %120 = vector.extract_strided_slice %116 {offsets = [0, 32], sizes = [2, 32], strides = [1, 1]} : vector<2x96xf32> to vector<2x32xf32>
    %121 = vector.extract_strided_slice %116 {offsets = [0, 64], sizes = [2, 32], strides = [1, 1]} : vector<2x96xf32> to vector<2x32xf32>
    %122 = arith.mulf %120, %99 : vector<2x32xf32>
    %123 = arith.mulf %119, %118 : vector<2x32xf32>
    %124 = arith.addf %122, %123 : vector<2x32xf32>
    %125 = math.tanh %124 : vector<2x32xf32>
    %126 = arith.mulf %121, %125 : vector<2x32xf32>
    %127 = arith.truncf %126 : vector<2x32xf32> to vector<2x32xbf16>
    %c0_38 = arith.constant 0 : index
    %c4_39 = arith.constant 4 : index
    %c0_40 = arith.constant 0 : index
    %128 = vector.load %arg3[%c0_38, %c4_39, %c0_40] : memref<2x8x32xbf16, #tpu.memory_space<vmem>>, vector<2x1x32xbf16>
    %129 = vector.shape_cast %128 : vector<2x1x32xbf16> to vector<2x32xbf16>
    %130 = vector.shape_cast %127 : vector<2x32xbf16> to vector<2x1x32xbf16>
    tpu.vector_store %arg3[%c0_38, %c4_39, %c0_40], %130 {strides = array<i32>} : memref<2x8x32xbf16, #tpu.memory_space<vmem>>, vector<2x1x32xbf16>,
    %c0_41 = arith.constant 0 : index
    %c5 = arith.constant 5 : index
    %c0_42 = arith.constant 0 : index
    %131 = vector.load %arg1[%c0_41, %c5, %c0_42] : memref<2x8x128xf32, #tpu.memory_space<vmem>>, vector<2x1x128xf32>
    %132 = vector.shape_cast %131 : vector<2x1x128xf32> to vector<2x128xf32>
    %133 = arith.truncf %126 : vector<2x32xf32> to vector<2x32xbf16>
    %cst_43 = arith.constant dense<0.000000e+00> : vector<2x128xf32>
    %134 = tpu.matmul %133, %3, %cst_43 {dimension_numbers = #tpu.dot_dimension_numbers<[1], [0], [0], [1], [0, 0, 1, 1], [], []>} : vector<2x32xbf16>, vector<32x128xbf16>, vector<2x128xf32> -> vector<2x128xf32>
    %135 = arith.addf %132, %134 : vector<2x128xf32>
    %136 = vector.extract_strided_slice %135 {offsets = [0, 0], sizes = [2, 96], strides = [1, 1]} : vector<2x128xf32> to vector<2x96xf32>
    %137 = arith.negf %136 : vector<2x96xf32>
    %138 = math.exp %137 : vector<2x96xf32>
    %cst_44 = arith.constant 1.000000e+00 : f32
    %139 = vector.broadcast %cst_44 : f32 to vector<2x96xf32>
    %140 = arith.addf %139, %138 : vector<2x96xf32>
    %141 = arith.divf %139, %140 : vector<2x96xf32>
    %142 = vector.extract_strided_slice %135 {offsets = [0, 96], sizes = [2, 32], strides = [1, 1]} : vector<2x128xf32> to vector<2x32xf32>
    %143 = math.tanh %142 : vector<2x32xf32>
    %144 = vector.extract_strided_slice %141 {offsets = [0, 0], sizes = [2, 32], strides = [1, 1]} : vector<2x96xf32> to vector<2x32xf32>
    %145 = vector.extract_strided_slice %141 {offsets = [0, 32], sizes = [2, 32], strides = [1, 1]} : vector<2x96xf32> to vector<2x32xf32>
    %146 = vector.extract_strided_slice %141 {offsets = [0, 64], sizes = [2, 32], strides = [1, 1]} : vector<2x96xf32> to vector<2x32xf32>
    %147 = arith.mulf %145, %124 : vector<2x32xf32>
    %148 = arith.mulf %144, %143 : vector<2x32xf32>
    %149 = arith.addf %147, %148 : vector<2x32xf32>
    %150 = math.tanh %149 : vector<2x32xf32>
    %151 = arith.mulf %146, %150 : vector<2x32xf32>
    %152 = arith.truncf %151 : vector<2x32xf32> to vector<2x32xbf16>
    %c0_45 = arith.constant 0 : index
    %c5_46 = arith.constant 5 : index
    %c0_47 = arith.constant 0 : index
    %153 = vector.load %arg3[%c0_45, %c5_46, %c0_47] : memref<2x8x32xbf16, #tpu.memory_space<vmem>>, vector<2x1x32xbf16>
    %154 = vector.shape_cast %153 : vector<2x1x32xbf16> to vector<2x32xbf16>
    %155 = vector.shape_cast %152 : vector<2x32xbf16> to vector<2x1x32xbf16>
    tpu.vector_store %arg3[%c0_45, %c5_46, %c0_47], %155 {strides = array<i32>} : memref<2x8x32xbf16, #tpu.memory_space<vmem>>, vector<2x1x32xbf16>,
    %c0_48 = arith.constant 0 : index
    %c6 = arith.constant 6 : index
    %c0_49 = arith.constant 0 : index
    %156 = vector.load %arg1[%c0_48, %c6, %c0_49] : memref<2x8x128xf32, #tpu.memory_space<vmem>>, vector<2x1x128xf32>
    %157 = vector.shape_cast %156 : vector<2x1x128xf32> to vector<2x128xf32>
    %158 = arith.truncf %151 : vector<2x32xf32> to vector<2x32xbf16>
    %cst_50 = arith.constant dense<0.000000e+00> : vector<2x128xf32>
    %159 = tpu.matmul %158, %3, %cst_50 {dimension_numbers = #tpu.dot_dimension_numbers<[1], [0], [0], [1], [0, 0, 1, 1], [], []>} : vector<2x32xbf16>, vector<32x128xbf16>, vector<2x128xf32> -> vector<2x128xf32>
    %160 = arith.addf %157, %159 : vector<2x128xf32>
    %161 = vector.extract_strided_slice %160 {offsets = [0, 0], sizes = [2, 96], strides = [1, 1]} : vector<2x128xf32> to vector<2x96xf32>
    %162 = arith.negf %161 : vector<2x96xf32>
    %163 = math.exp %162 : vector<2x96xf32>
    %cst_51 = arith.constant 1.000000e+00 : f32
    %164 = vector.broadcast %cst_51 : f32 to vector<2x96xf32>
    %165 = arith.addf %164, %163 : vector<2x96xf32>
    %166 = arith.divf %164, %165 : vector<2x96xf32>
    %167 = vector.extract_strided_slice %160 {offsets = [0, 96], sizes = [2, 32], strides = [1, 1]} : vector<2x128xf32> to vector<2x32xf32>
    %168 = math.tanh %167 : vector<2x32xf32>
    %169 = vector.extract_strided_slice %166 {offsets = [0, 0], sizes = [2, 32], strides = [1, 1]} : vector<2x96xf32> to vector<2x32xf32>
    %170 = vector.extract_strided_slice %166 {offsets = [0, 32], sizes = [2, 32], strides = [1, 1]} : vector<2x96xf32> to vector<2x32xf32>
    %171 = vector.extract_strided_slice %166 {offsets = [0, 64], sizes = [2, 32], strides = [1, 1]} : vector<2x96xf32> to vector<2x32xf32>
    %172 = arith.mulf %170, %149 : vector<2x32xf32>
    %173 = arith.mulf %169, %168 : vector<2x32xf32>
    %174 = arith.addf %172, %173 : vector<2x32xf32>
    %175 = math.tanh %174 : vector<2x32xf32>
    %176 = arith.mulf %171, %175 : vector<2x32xf32>
    %177 = arith.truncf %176 : vector<2x32xf32> to vector<2x32xbf16>
    %c0_52 = arith.constant 0 : index
    %c6_53 = arith.constant 6 : index
    %c0_54 = arith.constant 0 : index
    %178 = vector.load %arg3[%c0_52, %c6_53, %c0_54] : memref<2x8x32xbf16, #tpu.memory_space<vmem>>, vector<2x1x32xbf16>
    %179 = vector.shape_cast %178 : vector<2x1x32xbf16> to vector<2x32xbf16>
    %180 = vector.shape_cast %177 : vector<2x32xbf16> to vector<2x1x32xbf16>
    tpu.vector_store %arg3[%c0_52, %c6_53, %c0_54], %180 {strides = array<i32>} : memref<2x8x32xbf16, #tpu.memory_space<vmem>>, vector<2x1x32xbf16>,
    %c0_55 = arith.constant 0 : index
    %c7 = arith.constant 7 : index
    %c0_56 = arith.constant 0 : index
    %181 = vector.load %arg1[%c0_55, %c7, %c0_56] : memref<2x8x128xf32, #tpu.memory_space<vmem>>, vector<2x1x128xf32>
    %182 = vector.shape_cast %181 : vector<2x1x128xf32> to vector<2x128xf32>
    %183 = arith.truncf %176 : vector<2x32xf32> to vector<2x32xbf16>
    %cst_57 = arith.constant dense<0.000000e+00> : vector<2x128xf32>
    %184 = tpu.matmul %183, %3, %cst_57 {dimension_numbers = #tpu.dot_dimension_numbers<[1], [0], [0], [1], [0, 0, 1, 1], [], []>} : vector<2x32xbf16>, vector<32x128xbf16>, vector<2x128xf32> -> vector<2x128xf32>
    %185 = arith.addf %182, %184 : vector<2x128xf32>
    %186 = vector.extract_strided_slice %185 {offsets = [0, 0], sizes = [2, 96], strides = [1, 1]} : vector<2x128xf32> to vector<2x96xf32>
    %187 = arith.negf %186 : vector<2x96xf32>
    %188 = math.exp %187 : vector<2x96xf32>
    %cst_58 = arith.constant 1.000000e+00 : f32
    %189 = vector.broadcast %cst_58 : f32 to vector<2x96xf32>
    %190 = arith.addf %189, %188 : vector<2x96xf32>
    %191 = arith.divf %189, %190 : vector<2x96xf32>
    %192 = vector.extract_strided_slice %185 {offsets = [0, 96], sizes = [2, 32], strides = [1, 1]} : vector<2x128xf32> to vector<2x32xf32>
    %193 = math.tanh %192 : vector<2x32xf32>
    %194 = vector.extract_strided_slice %191 {offsets = [0, 0], sizes = [2, 32], strides = [1, 1]} : vector<2x96xf32> to vector<2x32xf32>
    %195 = vector.extract_strided_slice %191 {offsets = [0, 32], sizes = [2, 32], strides = [1, 1]} : vector<2x96xf32> to vector<2x32xf32>
    %196 = vector.extract_strided_slice %191 {offsets = [0, 64], sizes = [2, 32], strides = [1, 1]} : vector<2x96xf32> to vector<2x32xf32>
    %197 = arith.mulf %195, %174 : vector<2x32xf32>
    %198 = arith.mulf %194, %193 : vector<2x32xf32>
    %199 = arith.addf %197, %198 : vector<2x32xf32>
    %200 = math.tanh %199 : vector<2x32xf32>
    %201 = arith.mulf %196, %200 : vector<2x32xf32>
    %202 = arith.truncf %201 : vector<2x32xf32> to vector<2x32xbf16>
    %c0_59 = arith.constant 0 : index
    %c7_60 = arith.constant 7 : index
    %c0_61 = arith.constant 0 : index
    %203 = vector.load %arg3[%c0_59, %c7_60, %c0_61] : memref<2x8x32xbf16, #tpu.memory_space<vmem>>, vector<2x1x32xbf16>
    %204 = vector.shape_cast %203 : vector<2x1x32xbf16> to vector<2x32xbf16>
    %205 = vector.shape_cast %202 : vector<2x32xbf16> to vector<2x1x32xbf16>
    tpu.vector_store %arg3[%c0_59, %c7_60, %c0_61], %205 {strides = array<i32>} : memref<2x8x32xbf16, #tpu.memory_space<vmem>>, vector<2x1x32xbf16>,
    %c0_62 = arith.constant 0 : index
    %c0_63 = arith.constant 0 : index
    %206 = vector.load %arg4[%c0_62, %c0_63] : memref<2x32xf32, #tpu.memory_space<vmem>>, vector<2x32xf32>
    tpu.vector_store %arg4[%c0_62, %c0_63], %201 {strides = array<i32>} : memref<2x32xf32, #tpu.memory_space<vmem>>, vector<2x32xf32>,
    %c0_64 = arith.constant 0 : index
    %c0_65 = arith.constant 0 : index
    %207 = vector.load %arg5[%c0_64, %c0_65] : memref<2x32xf32, #tpu.memory_space<vmem>>, vector<2x32xf32>
    tpu.vector_store %arg5[%c0_64, %c0_65], %199 {strides = array<i32>} : memref<2x32xf32, #tpu.memory_space<vmem>>, vector<2x32xf32>,
    return
  }
  func.func @transform_0(%arg0: i32) -> (i32, i32, i32) {
    %c0_i32 = arith.constant 0 : i32
    %c0_i32_0 = arith.constant 0 : i32
    %c0_i32_1 = arith.constant 0 : i32
    return %c0_i32, %arg0, %c0_i32_0 : i32, i32, i32
  }
  func.func @transform_1(%arg0: i32) -> (i32, i32) {
    %c0_i32 = arith.constant 0 : i32
    %c0_i32_0 = arith.constant 0 : i32
    %c0_i32_1 = arith.constant 0 : i32
    return %c0_i32, %c0_i32_0 : i32, i32
  }
  func.func @transform_2(%arg0: i32) -> (i32, i32, i32) {
    %c0_i32 = arith.constant 0 : i32
    %c0_i32_0 = arith.constant 0 : i32
    %c0_i32_1 = arith.constant 0 : i32
    return %c0_i32, %arg0, %c0_i32_0 : i32, i32, i32
  }
}

module attributes {stable_mosaic.version = 11 : i64} {
  func.func @_matmul_bias_kernel(%arg0: i32, %arg1: memref<16x16xbf16, #tpu.memory_space<vmem>>, %arg2: memref<16x128xbf16, #tpu.memory_space<vmem>>, %arg3: memref<1x128xf32, #tpu.memory_space<vmem>>, %arg4: memref<16x128xf32, #tpu.memory_space<vmem>>) attributes {dimension_semantics = [#tpu.dimension_semantics<parallel>], iteration_bounds = array<i64: 1>, scalar_prefetch = 0 : i64, scratch_operands = 0 : i64, tpu.core_type = #tpu.core_type<tc>, window_params = [{transform_indices = @transform_0, window_bounds = array<i64: 16, 16>}, {pipeline_mode = #tpu.pipeline_mode<synchronous>, transform_indices = @transform_1, window_bounds = array<i64: 16, 128>}, {pipeline_mode = #tpu.pipeline_mode<synchronous>, transform_indices = @transform_2, window_bounds = array<i64: 1, 128>}, {transform_indices = @transform_3, window_bounds = array<i64: 16, 128>}]} {
    %c0 = arith.constant 0 : index
    %c0_0 = arith.constant 0 : index
    %0 = vector.load %arg1[%c0, %c0_0] : memref<16x16xbf16, #tpu.memory_space<vmem>>, vector<16x16xbf16>
    %c0_1 = arith.constant 0 : index
    %c0_2 = arith.constant 0 : index
    %1 = vector.load %arg2[%c0_1, %c0_2] : memref<16x128xbf16, #tpu.memory_space<vmem>>, vector<16x128xbf16>
    %cst = arith.constant dense<0.000000e+00> : vector<16x128xf32>
    %2 = tpu.matmul %0, %1, %cst {dimension_numbers = #tpu.dot_dimension_numbers<[1], [0], [0], [1], [0, 0, 1, 1], [], []>} : vector<16x16xbf16>, vector<16x128xbf16>, vector<16x128xf32> -> vector<16x128xf32>
    %c0_3 = arith.constant 0 : index
    %c0_4 = arith.constant 0 : index
    %3 = vector.load %arg3[%c0_3, %c0_4] : memref<1x128xf32, #tpu.memory_space<vmem>>, vector<1x128xf32>
    %4 = vector.broadcast %3 : vector<1x128xf32> to vector<16x128xf32>
    %5 = arith.addf %2, %4 : vector<16x128xf32>
    %c0_5 = arith.constant 0 : index
    %c0_6 = arith.constant 0 : index
    %6 = vector.load %arg4[%c0_5, %c0_6] : memref<16x128xf32, #tpu.memory_space<vmem>>, vector<16x128xf32>
    tpu.vector_store %arg4[%c0_5, %c0_6], %5 {strides = array<i32>} : memref<16x128xf32, #tpu.memory_space<vmem>>, vector<16x128xf32>,
    return
  }
  func.func @transform_0(%arg0: i32) -> (i32, i32) {
    %c0_i32 = arith.constant 0 : i32
    %c0_i32_0 = arith.constant 0 : i32
    return %arg0, %c0_i32 : i32, i32
  }
  func.func @transform_1(%arg0: i32) -> (i32, i32) {
    %c0_i32 = arith.constant 0 : i32
    %c0_i32_0 = arith.constant 0 : i32
    %c0_i32_1 = arith.constant 0 : i32
    return %c0_i32, %c0_i32_0 : i32, i32
  }
  func.func @transform_2(%arg0: i32) -> (i32, i32) {
    %c0_i32 = arith.constant 0 : i32
    %c0_i32_0 = arith.constant 0 : i32
    %c0_i32_1 = arith.constant 0 : i32
    return %c0_i32, %c0_i32_0 : i32, i32
  }
  func.func @transform_3(%arg0: i32) -> (i32, i32) {
    %c0_i32 = arith.constant 0 : i32
    %c0_i32_0 = arith.constant 0 : i32
    return %arg0, %c0_i32 : i32, i32
  }
}

</mosaic_0001>

<llo_original>
// kernel: lstm_forward.7
$region0: #{lstm_forward.7}
  #allocation0 [shape = 'u32[]', space=smem, size = 0x4, offset = 0x4, fixed_abs, tag = 'smem constant byte address 0x4 - core index']
  #allocation1 [shape = 'u32[144,128]{1,0:T(1,128)}', space=vmem, size = 0x12000, scoped, tag = 'internal scratch']
  %s0 = inlined_call_operand.hbm [shape: bf16[16,32], index: 0, kind: input, shape index: {}]
  %s1 = inlined_call_operand.hbm [shape: bf16[32,128], index: 1, kind: input, shape index: {}]
  %s2 = inlined_call_operand.hbm [shape: f32[1,128], index: 2, kind: input, shape index: {}]
  %s3 = inlined_call_operand.hbm [shape: f32[16,128], index: 3, kind: output, shape index: {}]
  %s4 = sld [smem:[#allocation0]]
  $region34: #{lstm_forward.7} parent=0
    _
  %s6 = ssub.s32 1, %s4
  %s7 = scalar_select 0, %s6, %s4
  $region1: #{lstm_forward.7} parent=0
    #allocation2 [shape = 'u8[4096]{0}', space=vmem, size = 0x1000, scoped, tag = 'input window, operand 0, single buffered']
    #allocation3 [shape = 's32[1]{0}', space=sflag, size = 0x4, scoped, tag = 'scoped memory for lstm_forward.7']
    #allocation4 [shape = 's32[1]{0}', space=sflag, size = 0x4, scoped, tag = 'scoped memory for lstm_forward.7']
    #allocation5 [shape = 'u8[8192]{0}', space=vmem, size = 0x2000, scoped, tag = 'input window, operand 1, single buffered']
    #allocation6 [shape = 's32[1]{0}', space=sflag, size = 0x4, scoped, tag = 'scoped memory for lstm_forward.7']
    #allocation7 [shape = 'u8[512]{0}', space=vmem, size = 0x400, scoped, tag = 'input window, operand 2, single buffered']
    #allocation8 [shape = 'u8[8192]{0}', space=vmem, size = 0x2000, scoped, tag = 'output window, operand 0, single buffered']
    %8 = vsyncpa [#allocation3], 0
    %9 = vsyncpa [#allocation6], 0
    %10 = vsyncpa [#allocation4], 0
    // Predicated region
    $region2: #{lstm_forward.7} parent=1 // pred_check
      _
    $region3: #{lstm_forward.7} parent=1 // pred_check_branch
      %12 = sbr.rel (0) target = $region5
    $region4: #{lstm_forward.7} parent=1 // pred_region
      %s14 = ssub.s32 128, 128
      %15 = vsyncadd [#allocation3], %s14
      %s16 = sshll.u32 [#allocation2], 4
      %s17 = int_to_ptr.vmem [resolvable:$true] %s16
      %22 = dma.hbm_to_vmem [thread:$0]  %s0, 128, %s17, [#allocation3], 64, 64, 4
    $region5: #{lstm_forward.7} parent=1 // pred_fallthru
      _
    // Predicated region
    $region6: #{lstm_forward.7} parent=1 // pred_check
      _
    $region7: #{lstm_forward.7} parent=1 // pred_check_branch
      %24 = sbr.rel (0) target = $region9
    $region8: #{lstm_forward.7} parent=1 // pred_region
      %s26 = ssub.s32 256, 256
      %27 = vsyncadd [#allocation6], %s26
      %s28 = sshll.u32 [#allocation5], 4
      %s29 = int_to_ptr.vmem [resolvable:$true] %s28
      %34 = dma.hbm_to_vmem [thread:$0]  %s1, 256, %s29, [#allocation6], 64, 64, 4
    $region9: #{lstm_forward.7} parent=1 // pred_fallthru
      _
    // Predicated region
    $region10: #{lstm_forward.7} parent=1 // pred_check
      _
    $region11: #{lstm_forward.7} parent=1 // pred_check_branch
      %36 = sbr.rel (0) target = $region13
    $region12: #{lstm_forward.7} parent=1 // pred_region
      %s38 = ssub.s32 16, 16
      %39 = vsyncadd [#allocation6], %s38
      %s41 = sshll.u32 [#allocation7], 4
      %s42 = int_to_ptr.vmem [resolvable:$true] %s41
      %44 = dma.hbm_to_vmem [thread:$0]  %s2, 16, %s42, [#allocation6]
    $region13: #{lstm_forward.7} parent=1 // pred_fallthru
      _
    // Predicated region
    $region14: #{lstm_forward.7} parent=1 // pred_check
      _
    $region15: #{lstm_forward.7} parent=1 // pred_check_branch
      %46 = sbr.rel (0) target = $region17
    $region16: #{lstm_forward.7} parent=1 // pred_region
      %47 = dma.done [#allocation3], 128
    $region17: #{lstm_forward.7} parent=1 // pred_fallthru
      _
    // Predicated region
    $region18: #{lstm_forward.7} parent=1 // pred_check
      _
    $region19: #{lstm_forward.7} parent=1 // pred_check_branch
      %49 = sbr.rel (0) target = $region21
    $region20: #{lstm_forward.7} parent=1 // pred_region
      %50 = dma.done [#allocation6], 256
    $region21: #{lstm_forward.7} parent=1 // pred_fallthru
      _
    // Predicated region
    $region22: #{lstm_forward.7} parent=1 // pred_check
      _
    $region23: #{lstm_forward.7} parent=1 // pred_check_branch
      %52 = sbr.rel (0) target = $region25
    $region24: #{lstm_forward.7} parent=1 // pred_region
      %53 = dma.done [#allocation6], 16
    $region25: #{lstm_forward.7} parent=1 // pred_fallthru
      _
    %v55 = vld [vmem:[#allocation2] sm:$0xf]
    %v56 = vld [vmem:[#allocation2 + $0x4] sm:$0xf]
    %v57 = vld [vmem:[#allocation5] sm:$0xf]
    %v58 = vld [vmem:[#allocation5 + $0x4] sm:$0xf]
    %v59 = vld [vmem:[#allocation5 + $0x8] sm:$0xf]
    %v60 = vld [vmem:[#allocation5 + $0xc] sm:$0xf]
    %v61 = vld [vmem:[#allocation7] sm:$0x1]
    %v63 = vlaneseq
    %v64 = vshrl.u32 %v63, 7
    %v65 = vsub.s32 0, %v64
    %v66 = vrot.slane %v61, %v65
    %v70 = vunpack.c.l.b16 %v55
    %v71 = vunpack.c.l.b16 %v56
    %v72 = vpack.c.b16 %v71, %v70
    %v77 = vunpack.c.l.b16 %v57
    %v78 = vunpack.c.l.b16 %v58
    %v79 = vunpack.c.l.b16 %v59
    %v80 = vunpack.c.l.b16 %v60
    %v81 = vpack.c.b16 %v78, %v77
    %v82 = vpack.c.b16 %v80, %v79
    %vm85 = vcmask 261120
    %v87 = vsel %vm85, %v72, 0
    %89 = vmatprep.subr.bf16.mxu0 0
    %90 = vmatpush1.bf16.msra.mxu0 %v81
    %91 = vmatprep.subr.bf16.mxu0 0
    %92 = vmatpush1.bf16.msra.mxu0 %v82
    %93 = vmatprep.subr.bf16.mxu0 0
    %94 = vmatpush1.bf16.msra.mxu0 0
    %95 = vmatprep.subr.bf16.mxu0 0
    %96 = vmatpush1.bf16.msra.mxu0 0
    %97 = vmatprep.subr.bf16.mxu0 0
    %98 = vmatpush1.bf16.msra.mxu0 0
    %99 = vmatprep.subr.bf16.mxu0 0
    %100 = vmatpush1.bf16.msra.mxu0 0
    %101 = vmatprep.subr.bf16.mxu0 0
    %102 = vmatpush1.bf16.msra.mxu0 0
    %103 = vmatprep.subr.bf16.mxu0 0
    %104 = vmatpush1.bf16.msra.mxu0 0
    %105 = vmatprep.subr.bf16.mxu0 0
    %106 = vmatpush1.bf16.msra.mxu0 0
    %107 = vmatprep.subr.bf16.mxu0 0
    %108 = vmatpush1.bf16.msra.mxu0 0
    %109 = vmatprep.subr.bf16.mxu0 0
    %110 = vmatpush1.bf16.msra.mxu0 0
    %111 = vmatprep.subr.bf16.mxu0 0
    %112 = vmatpush1.bf16.msra.mxu0 0
    %113 = vmatprep.subr.bf16.mxu0 0
    %114 = vmatpush1.bf16.msra.mxu0 0
    %115 = vmatprep.subr.bf16.mxu0 0
    %116 = vmatpush1.bf16.msra.mxu0 0
    %117 = vmatprep.subr.bf16.mxu0 0
    %118 = vmatpush1.bf16.msra.mxu0 0
    %119 = vmatprep.subr.bf16.mxu0 0
    %120 = vmatpush1.bf16.msra.mxu0 0
    %121 = vmatprep.mubr.bf16.mxu0 0
    %122 = vmatmul.mubr.bf16.gmra.mrb[0].mxu0 %v87
    %v123 = vpop.f32.mrb[0].mxu0
    %v124 = vadd.f32 %v66, %v123
    %v125 = vpop.f32.mrb[0].mxu0
    %v126 = vpop.f32.mrb[0].mxu0
    %v127 = vadd.f32 %v66, %v126
    %v128 = vpop.f32.mrb[0].mxu0
    %129 = vdwg.mxu0
    %130 = vst [vmem:[#allocation8] sm:$0xff] %v124
    %131 = vst [vmem:[#allocation8 + $0x8] sm:$0xff] %v127
    // Predicated region
    $region26: #{lstm_forward.7} parent=1 // pred_check
      _
    $region27: #{lstm_forward.7} parent=1 // pred_check_branch
      %133 = sbr.rel (0) target = $region29
    $region28: #{lstm_forward.7} parent=1 // pred_region
      %s135 = ssub.s32 256, 256
      %136 = vsyncadd [#allocation4], %s135
      %s137 = sshll.u32 [#allocation8], 4
      %s138 = int_to_ptr.vmem [resolvable:$true] %s137
      %143 = dma.vmem_to_hbm [thread:$0]  %s138, 256, %s3, [#allocation4], 128, 128, 8
    $region29: #{lstm_forward.7} parent=1 // pred_fallthru
      _
    // Predicated region
    $region30: #{lstm_forward.7} parent=1 // pred_check
      _
    $region31: #{lstm_forward.7} parent=1 // pred_check_branch
      %145 = sbr.rel (0) target = $region33
    $region32: #{lstm_forward.7} parent=1 // pred_region
      %146 = dma.done [#allocation4], 256
    $region33: #{lstm_forward.7} parent=1 // pred_fallthru
      _
    %147 = vsyncpa [#allocation3], 1
    %148 = vsyncpa [#allocation6], 1
    %149 = vsyncpa [#allocation4], 1

// kernel: lstm_forward.5
$region0: #{lstm_forward.5}
  #allocation0 [shape = 'u32[]', space=smem, size = 0x4, offset = 0x4, fixed_abs, tag = 'smem constant byte address 0x4 - core index']
  #allocation1 [shape = 'u32[144,128]{1,0:T(1,128)}', space=vmem, size = 0x12000, scoped, tag = 'internal scratch']
  %s0 = inlined_call_operand.hbm [shape: bf16[16,16], index: 0, kind: input, shape index: {}]
  %s1 = inlined_call_operand.hbm [shape: bf16[16,128], index: 1, kind: input, shape index: {}]
  %s2 = inlined_call_operand.hbm [shape: f32[1,128], index: 2, kind: input, shape index: {}]
  %s3 = inlined_call_operand.hbm [shape: f32[16,128], index: 3, kind: output, shape index: {}]
  %s4 = sld [smem:[#allocation0]]
  $region34: #{lstm_forward.5} parent=0
    _
  %s6 = ssub.s32 1, %s4
  %s7 = scalar_select 0, %s6, %s4
  $region1: #{lstm_forward.5} parent=0
    #allocation2 [shape = 'u8[4096]{0}', space=vmem, size = 0x1000, scoped, tag = 'input window, operand 0, single buffered']
    #allocation3 [shape = 's32[1]{0}', space=sflag, size = 0x4, scoped, tag = 'scoped memory for lstm_forward.5']
    #allocation4 [shape = 's32[1]{0}', space=sflag, size = 0x4, scoped, tag = 'scoped memory for lstm_forward.5']
    #allocation5 [shape = 'u8[4096]{0}', space=vmem, size = 0x1000, scoped, tag = 'input window, operand 1, single buffered']
    #allocation6 [shape = 's32[1]{0}', space=sflag, size = 0x4, scoped, tag = 'scoped memory for lstm_forward.5']
    #allocation7 [shape = 'u8[512]{0}', space=vmem, size = 0x400, scoped, tag = 'input window, operand 2, single buffered']
    #allocation8 [shape = 'u8[8192]{0}', space=vmem, size = 0x2000, scoped, tag = 'output window, operand 0, single buffered']
    %8 = vsyncpa [#allocation3], 0
    %9 = vsyncpa [#allocation6], 0
    %10 = vsyncpa [#allocation4], 0
    // Predicated region
    $region2: #{lstm_forward.5} parent=1 // pred_check
      _
    $region3: #{lstm_forward.5} parent=1 // pred_check_branch
      %12 = sbr.rel (0) target = $region5
    $region4: #{lstm_forward.5} parent=1 // pred_region
      %s14 = ssub.s32 128, 128
      %15 = vsyncadd [#allocation3], %s14
      %s16 = sshll.u32 [#allocation2], 4
      %s17 = int_to_ptr.vmem [resolvable:$true] %s16
      %22 = dma.hbm_to_vmem [thread:$0]  %s0, 128, %s17, [#allocation3], 64, 64, 4
    $region5: #{lstm_forward.5} parent=1 // pred_fallthru
      _
    // Predicated region
    $region6: #{lstm_forward.5} parent=1 // pred_check
      _
    $region7: #{lstm_forward.5} parent=1 // pred_check_branch
      %24 = sbr.rel (0) target = $region9
    $region8: #{lstm_forward.5} parent=1 // pred_region
      %s26 = ssub.s32 128, 128
      %27 = vsyncadd [#allocation6], %s26
      %s28 = sshll.u32 [#allocation5], 4
      %s29 = int_to_ptr.vmem [resolvable:$true] %s28
      %34 = dma.hbm_to_vmem [thread:$0]  %s1, 128, %s29, [#allocation6], 64, 64, 4
    $region9: #{lstm_forward.5} parent=1 // pred_fallthru
      _
    // Predicated region
    $region10: #{lstm_forward.5} parent=1 // pred_check
      _
    $region11: #{lstm_forward.5} parent=1 // pred_check_branch
      %36 = sbr.rel (0) target = $region13
    $region12: #{lstm_forward.5} parent=1 // pred_region
      %s38 = ssub.s32 16, 16
      %39 = vsyncadd [#allocation6], %s38
      %s41 = sshll.u32 [#allocation7], 4
      %s42 = int_to_ptr.vmem [resolvable:$true] %s41
      %44 = dma.hbm_to_vmem [thread:$0]  %s2, 16, %s42, [#allocation6]
    $region13: #{lstm_forward.5} parent=1 // pred_fallthru
      _
    // Predicated region
    $region14: #{lstm_forward.5} parent=1 // pred_check
      _
    $region15: #{lstm_forward.5} parent=1 // pred_check_branch
      %46 = sbr.rel (0) target = $region17
    $region16: #{lstm_forward.5} parent=1 // pred_region
      %47 = dma.done [#allocation3], 128
    $region17: #{lstm_forward.5} parent=1 // pred_fallthru
      _
    // Predicated region
    $region18: #{lstm_forward.5} parent=1 // pred_check
      _
    $region19: #{lstm_forward.5} parent=1 // pred_check_branch
      %49 = sbr.rel (0) target = $region21
    $region20: #{lstm_forward.5} parent=1 // pred_region
      %50 = dma.done [#allocation6], 128
    $region21: #{lstm_forward.5} parent=1 // pred_fallthru
      _
    // Predicated region
    $region22: #{lstm_forward.5} parent=1 // pred_check
      _
    $region23: #{lstm_forward.5} parent=1 // pred_check_branch
      %52 = sbr.rel (0) target = $region25
    $region24: #{lstm_forward.5} parent=1 // pred_region
      %53 = dma.done [#allocation6], 16
    $region25: #{lstm_forward.5} parent=1 // pred_fallthru
      _
    %v55 = vld [vmem:[#allocation2] sm:$0xf]
    %v56 = vld [vmem:[#allocation2 + $0x4] sm:$0xf]
    %v57 = vld [vmem:[#allocation5] sm:$0xf]
    %v58 = vld [vmem:[#allocation5 + $0x4] sm:$0xf]
    %v59 = vld [vmem:[#allocation7] sm:$0x1]
    %v61 = vlaneseq
    %v62 = vshrl.u32 %v61, 7
    %v63 = vsub.s32 0, %v62
    %v64 = vrot.slane %v59, %v63
    %v68 = vunpack.c.l.b16 %v55
    %v69 = vunpack.c.l.b16 %v56
    %v70 = vpack.c.b16 %v69, %v68
    %v73 = vunpack.c.l.b16 %v57
    %v74 = vunpack.c.l.b16 %v58
    %v75 = vpack.c.b16 %v74, %v73
    %vm77 = vcmask 130048
    %v79 = vsel %vm77, %v70, 0
    %81 = vmatprep.subr.bf16.mxu0 0
    %82 = vmatpush1.bf16.msra.mxu0 %v75
    %83 = vmatprep.subr.bf16.mxu0 0
    %84 = vmatpush1.bf16.msra.mxu0 0
    %85 = vmatprep.subr.bf16.mxu0 0
    %86 = vmatpush1.bf16.msra.mxu0 0
    %87 = vmatprep.subr.bf16.mxu0 0
    %88 = vmatpush1.bf16.msra.mxu0 0
    %89 = vmatprep.subr.bf16.mxu0 0
    %90 = vmatpush1.bf16.msra.mxu0 0
    %91 = vmatprep.subr.bf16.mxu0 0
    %92 = vmatpush1.bf16.msra.mxu0 0
    %93 = vmatprep.subr.bf16.mxu0 0
    %94 = vmatpush1.bf16.msra.mxu0 0
    %95 = vmatprep.subr.bf16.mxu0 0
    %96 = vmatpush1.bf16.msra.mxu0 0
    %97 = vmatprep.subr.bf16.mxu0 0
    %98 = vmatpush1.bf16.msra.mxu0 0
    %99 = vmatprep.subr.bf16.mxu0 0
    %100 = vmatpush1.bf16.msra.mxu0 0
    %101 = vmatprep.subr.bf16.mxu0 0
    %102 = vmatpush1.bf16.msra.mxu0 0
    %103 = vmatprep.subr.bf16.mxu0 0
    %104 = vmatpush1.bf16.msra.mxu0 0
    %105 = vmatprep.subr.bf16.mxu0 0
    %106 = vmatpush1.bf16.msra.mxu0 0
    %107 = vmatprep.subr.bf16.mxu0 0
    %108 = vmatpush1.bf16.msra.mxu0 0
    %109 = vmatprep.subr.bf16.mxu0 0
    %110 = vmatpush1.bf16.msra.mxu0 0
    %111 = vmatprep.subr.bf16.mxu0 0
    %112 = vmatpush1.bf16.msra.mxu0 0
    %113 = vmatprep.mubr.bf16.mxu0 0
    %114 = vmatmul.mubr.bf16.gmra.mrb[0].mxu0 %v79
    %v115 = vpop.f32.mrb[0].mxu0
    %v116 = vadd.f32 %v64, %v115
    %v117 = vpop.f32.mrb[0].mxu0
    %v118 = vpop.f32.mrb[0].mxu0
    %v119 = vadd.f32 %v64, %v118
    %v120 = vpop.f32.mrb[0].mxu0
    %121 = vdwg.mxu0
    %122 = vst [vmem:[#allocation8] sm:$0xff] %v116
    %123 = vst [vmem:[#allocation8 + $0x8] sm:$0xff] %v119
    // Predicated region
    $region26: #{lstm_forward.5} parent=1 // pred_check
      _
    $region27: #{lstm_forward.5} parent=1 // pred_check_branch
      %125 = sbr.rel (0) target = $region29
    $region28: #{lstm_forward.5} parent=1 // pred_region
      %s127 = ssub.s32 256, 256
      %128 = vsyncadd [#allocation4], %s127
      %s129 = sshll.u32 [#allocation8], 4
      %s130 = int_to_ptr.vmem [resolvable:$true] %s129
      %135 = dma.vmem_to_hbm [thread:$0]  %s130, 256, %s3, [#allocation4], 128, 128, 8
    $region29: #{lstm_forward.5} parent=1 // pred_fallthru
      _
    // Predicated region
    $region30: #{lstm_forward.5} parent=1 // pred_check
      _
    $region31: #{lstm_forward.5} parent=1 // pred_check_branch
      %137 = sbr.rel (0) target = $region33
    $region32: #{lstm_forward.5} parent=1 // pred_region
      %138 = dma.done [#allocation4], 256
    $region33: #{lstm_forward.5} parent=1 // pred_fallthru
      _
    %139 = vsyncpa [#allocation3], 1
    %140 = vsyncpa [#allocation6], 1
    %141 = vsyncpa [#allocation4], 1

// kernel: lstm_forward.6
$region0: #{lstm_forward.6}
  #allocation0 [shape = 'u32[]', space=smem, size = 0x4, offset = 0x4, fixed_abs, tag = 'smem constant byte address 0x4 - core index']
  #allocation1 [shape = 'u32[144,128]{1,0:T(1,128)}', space=vmem, size = 0x12000, scoped, tag = 'internal scratch']
  #allocation2 [shape = 'f32[2,32]{1,0:T(2,128)}', space=vmem, size = 0x400, scoped, tag = 'scratch operand']
  #allocation3 [shape = 'f32[2,32]{1,0:T(2,128)}', space=vmem, size = 0x400, scoped, tag = 'scratch operand']
  %s0 = inlined_call_operand.hbm [shape: f32[2,8,128], index: 0, kind: input, shape index: {}]
  %s1 = inlined_call_operand.hbm [shape: bf16[32,128], index: 1, kind: input, shape index: {}]
  %s2 = inlined_call_operand.hbm [shape: bf16[2,8,32], index: 2, kind: output, shape index: {}]
  %s3 = sld [smem:[#allocation0]]
  $region30: #{lstm_forward.6} parent=0
    _
  %s5 = ssub.s32 1, %s3
  %s6 = scalar_select 0, %s5, %s3
  $region1: #{lstm_forward.6} parent=0
    #allocation4 [shape = 'u8[8192]{0}', space=vmem, size = 0x2000, scoped, tag = 'input window, operand 0, single buffered']
    #allocation5 [shape = 's32[1]{0}', space=sflag, size = 0x4, scoped, tag = 'scoped memory for lstm_forward.6']
    #allocation6 [shape = 's32[1]{0}', space=sflag, size = 0x4, scoped, tag = 'scoped memory for lstm_forward.6']
    #allocation7 [shape = 'u8[8192]{0}', space=vmem, size = 0x2000, scoped, tag = 'input window, operand 1, single buffered']
    #allocation8 [shape = 's32[1]{0}', space=sflag, size = 0x4, scoped, tag = 'scoped memory for lstm_forward.6']
    #allocation9 [shape = 'u8[4096]{0}', space=vmem, size = 0x1000, scoped, tag = 'output window, operand 0, single buffered']
    %7 = vsyncpa [#allocation5], 0
    %8 = vsyncpa [#allocation8], 0
    %9 = vsyncpa [#allocation6], 0
    // Predicated region
    $region2: #{lstm_forward.6} parent=1 // pred_check
      _
    $region3: #{lstm_forward.6} parent=1 // pred_check_branch
      %11 = sbr.rel (0) target = $region5
    $region4: #{lstm_forward.6} parent=1 // pred_region
      %s13 = ssub.s32 256, 256
      %14 = vsyncadd [#allocation5], %s13
      %s15 = sshll.u32 [#allocation4], 4
      %s16 = int_to_ptr.vmem [resolvable:$true] %s15
      %21 = dma.hbm_to_vmem [thread:$0]  %s0, 256, %s16, [#allocation5], 128, 128, 8
    $region5: #{lstm_forward.6} parent=1 // pred_fallthru
      _
    // Predicated region
    $region6: #{lstm_forward.6} parent=1 // pred_check
      _
    $region7: #{lstm_forward.6} parent=1 // pred_check_branch
      %23 = sbr.rel (0) target = $region9
    $region8: #{lstm_forward.6} parent=1 // pred_region
      %s25 = ssub.s32 256, 256
      %26 = vsyncadd [#allocation8], %s25
      %s27 = sshll.u32 [#allocation7], 4
      %s28 = int_to_ptr.vmem [resolvable:$true] %s27
      %33 = dma.hbm_to_vmem [thread:$0]  %s1, 256, %s28, [#allocation8], 64, 64, 4
    $region9: #{lstm_forward.6} parent=1 // pred_fallthru
      _
    // Predicated region
    $region10: #{lstm_forward.6} parent=1 // pred_check
      _
    $region11: #{lstm_forward.6} parent=1 // pred_check_branch
      %35 = sbr.rel (0) target = $region13
    $region12: #{lstm_forward.6} parent=1 // pred_region
      %36 = dma.done [#allocation5], 256
    $region13: #{lstm_forward.6} parent=1 // pred_fallthru
      _
    // Predicated region
    $region14: #{lstm_forward.6} parent=1 // pred_check
      _
    $region15: #{lstm_forward.6} parent=1 // pred_check_branch
      %38 = sbr.rel (0) target = $region17
    $region16: #{lstm_forward.6} parent=1 // pred_region
      %39 = dma.done [#allocation8], 256
    $region17: #{lstm_forward.6} parent=1 // pred_fallthru
      _
    %p41 = scmp.eq.s32.totalorder 0, 0
    // Predicated region
    $region18: #{lstm_forward.6} parent=1 // pred_check
      %p42 = pneg %p41
    $region19: #{lstm_forward.6} parent=1 // pred_check_branch
      %44 = sbr.rel (%p42) target = $region21
    $region20: #{lstm_forward.6} parent=1 // pred_region
      %vm45 = vcmask 254976
      %46 = vst.msk [vmem:[#allocation2] sm:$0x3] %vm45, 0.0
      %47 = vst.msk [vmem:[#allocation3] sm:$0x3] %vm45, 0.0
    $region21: #{lstm_forward.6} parent=1 // pred_fallthru
      _
    %v48 = vld [vmem:[#allocation7] sm:$0xf]
    %v49 = vld [vmem:[#allocation7 + $0x4] sm:$0xf]
    %v50 = vld [vmem:[#allocation7 + $0x8] sm:$0xf]
    %v51 = vld [vmem:[#allocation7 + $0xc] sm:$0xf]
    %v52 = vld [vmem:[#allocation2] sm:$0x3]
    %v53 = vld [vmem:[#allocation3] sm:$0x3]
    %v54 = vld [vmem:[#allocation4] sm:$0x1]
    %v55 = vld [vmem:[#allocation4 + $0x8] sm:$0x1]
    %v56 = vpack.c.bf16 %v52, %v52
    %v61 = vunpack.c.l.b16 %v48
    %v62 = vunpack.c.l.b16 %v49
    %v63 = vunpack.c.l.b16 %v50
    %v64 = vunpack.c.l.b16 %v51
    %v65 = vpack.c.b16 %v62, %v61
    %v66 = vpack.c.b16 %v64, %v63
    %vm69 = vcmask 261120
    %v71 = vsel %vm69, %v56, 0
    %73 = vmatprep.subr.bf16.mxu0 0
    %74 = vmatpush1.bf16.msra.mxu0 %v65
    %75 = vmatprep.subr.bf16.mxu0 0
    %76 = vmatpush1.bf16.msra.mxu0 %v66
    %77 = vmatprep.subr.bf16.mxu0 0
    %78 = vmatpush1.bf16.msra.mxu0 0
    %79 = vmatprep.subr.bf16.mxu0 0
    %80 = vmatpush1.bf16.msra.mxu0 0
    %81 = vmatprep.subr.bf16.mxu0 0
    %82 = vmatpush1.bf16.msra.mxu0 0
    %83 = vmatprep.subr.bf16.mxu0 0
    %84 = vmatpush1.bf16.msra.mxu0 0
    %85 = vmatprep.subr.bf16.mxu0 0
    %86 = vmatpush1.bf16.msra.mxu0 0
    %87 = vmatprep.subr.bf16.mxu0 0
    %88 = vmatpush1.bf16.msra.mxu0 0
    %89 = vmatprep.subr.bf16.mxu0 0
    %90 = vmatpush1.bf16.msra.mxu0 0
    %91 = vmatprep.subr.bf16.mxu0 0
    %92 = vmatpush1.bf16.msra.mxu0 0
    %93 = vmatprep.subr.bf16.mxu0 0
    %94 = vmatpush1.bf16.msra.mxu0 0
    %95 = vmatprep.subr.bf16.mxu0 0
    %96 = vmatpush1.bf16.msra.mxu0 0
    %97 = vmatprep.subr.bf16.mxu0 0
    %98 = vmatpush1.bf16.msra.mxu0 0
    %99 = vmatprep.subr.bf16.mxu0 0
    %100 = vmatpush1.bf16.msra.mxu0 0
    %101 = vmatprep.subr.bf16.mxu0 0
    %102 = vmatpush1.bf16.msra.mxu0 0
    %103 = vmatprep.subr.bf16.mxu0 0
    %104 = vmatpush1.bf16.msra.mxu0 0
    %105 = vmatprep.mubr.bf16.mxu0 0
    %106 = vmatmul.mubr.bf16.gmra.mrb[0].mxu0 %v71
    %v107 = vpop.f32.mrb[0].mxu0
    %v108 = vadd.f32 0.0, %v107
    %v109 = vpop.f32.mrb[0].mxu0
    %v110 = vpop.f32.mrb[0].mxu0
    %v111 = vpop.f32.mrb[0].mxu0
    %112 = vdwg.mxu0
    %v114 = vrot.slane %v108, 1
    %v117 = vadd.f32 %v54, %v108
    %v118 = vadd.f32 %v55, %v114
    %v119 = vxor.u32 %v117, 2147483648
    %v120 = vxor.u32 %v118, 2147483648
    %v121 = vmul.f32 %v119, 1.442695
    %v122 = vpow.pop %v121
    %v123 = vmul.f32 %v120, 1.442695
    %v124 = vpow.pop %v123
    %v125 = vadd.f32 %v122, 1.0
    %v126 = vadd.f32 %v124, 1.0
    %v127 = vrcp.pop %v125
    %v128 = vmul.f32 1.0, %v127
    %v129 = vrcp.pop %v126
    %v130 = vmul.f32 1.0, %v129
    %v131 = vtanh.pop %v117
    %v132 = vtanh.pop %v118
    %v134 = vrot.slane %v53, 1
    %135 = vrot.lane.b32.xlu0 %v53, 32
    %v136 = vpop.permute.xlu0 %135
    %137 = vrot.lane.b32.xlu0 %v134, 32
    %v138 = vpop.permute.xlu0 %137
    %v141 = vmul.f32 %v128, %v136
    %v142 = vmul.f32 %v130, %v138
    %145 = vrot.lane.b32.xlu0 %v131, 32
    %v146 = vpop.permute.xlu0 %145
    %147 = vrot.lane.b32.xlu0 %v132, 32
    %v148 = vpop.permute.xlu0 %147
    %v151 = vmul.f32 %v128, %v146
    %v152 = vmul.f32 %v130, %v148
    %155 = vrot.lane.b32.xlu0 %v151, 32
    %v156 = vpop.permute.xlu0 %155
    %157 = vrot.lane.b32.xlu0 %v152, 32
    %v158 = vpop.permute.xlu0 %157
    %v161 = vadd.f32 %v141, %v156
    %v162 = vadd.f32 %v142, %v158
    %v163 = vtanh.pop %v161
    %v164 = vtanh.pop %v162
    %167 = vrot.lane.b32.xlu0 %v163, 32
    %v168 = vpop.permute.xlu0 %167
    %169 = vrot.lane.b32.xlu0 %v164, 32
    %v170 = vpop.permute.xlu0 %169
    %v173 = vmul.f32 %v128, %v168
    %v174 = vmul.f32 %v130, %v170
    %v175 = vpack.c.bf16 %v173, %v173
    %v176 = vpack.c.bf16 %v174, %v174
    %v179 = vunpack.c.l.b16 %v175
    %v180 = vunpack.c.l.b16 %v176
    %v181 = vpack.c.b16 %v179, %v179
    %v182 = vpack.c.b16 %v180, %v180
    %183 = vrot.lane.b32.xlu0 %v181, 64
    %v184 = vpop.permute.xlu0 %183
    %185 = vrot.lane.b32.xlu0 %v182, 64
    %v186 = vpop.permute.xlu0 %185
    %vm189 = vcmask 253952
    %vm190 = vsmask.f32 256
    %vm191 = vmand %vm189, %vm190
    %v192 = vld [vmem:[#allocation9] sm:$0x1]
    %v193 = vsel %vm191, %v184, %v192
    %194 = vst [vmem:[#allocation9] sm:$0x1] %v193
    %v195 = vld [vmem:[#allocation9 + $0x4] sm:$0x1]
    %v196 = vsel %vm191, %v186, %v195
    %197 = vst [vmem:[#allocation9 + $0x4] sm:$0x1] %v196
    %v198 = vld [vmem:[#allocation4 + $0x1] sm:$0x1]
    %v199 = vld [vmem:[#allocation4 + $0x9] sm:$0x1]
    %v200 = vrot.slane %v180, 7
    %vm201 = vcmask 1041409
    %v202 = vsel %vm201, %v200, %v179
    %v203 = vpack.c.b16 %v202, %v202
    %204 = vrot.lane.b32.xlu0 %v203, 64
    %v205 = vpop.permute.xlu0 %204
    %v207 = vsel %vm69, %v205, 0
    %209 = vmatprep.subr.bf16.mxu0 0
    %210 = vmatpush1.bf16.msra.mxu0 %v65
    %211 = vmatprep.subr.bf16.mxu0 0
    %212 = vmatpush1.bf16.msra.mxu0 %v66
    %213 = vmatprep.subr.bf16.mxu0 0
    %214 = vmatpush1.bf16.msra.mxu0 0
    %215 = vmatprep.subr.bf16.mxu0 0
    %216 = vmatpush1.bf16.msra.mxu0 0
    %217 = vmatprep.subr.bf16.mxu0 0
    %218 = vmatpush1.bf16.msra.mxu0 0
    %219 = vmatprep.subr.bf16.mxu0 0
    %220 = vmatpush1.bf16.msra.mxu0 0
    %221 = vmatprep.subr.bf16.mxu0 0
    %222 = vmatpush1.bf16.msra.mxu0 0
    %223 = vmatprep.subr.bf16.mxu0 0
    %224 = vmatpush1.bf16.msra.mxu0 0
    %225 = vmatprep.subr.bf16.mxu0 0
    %226 = vmatpush1.bf16.msra.mxu0 0
    %227 = vmatprep.subr.bf16.mxu0 0
    %228 = vmatpush1.bf16.msra.mxu0 0
    %229 = vmatprep.subr.bf16.mxu0 0
    %230 = vmatpush1.bf16.msra.mxu0 0
    %231 = vmatprep.subr.bf16.mxu0 0
    %232 = vmatpush1.bf16.msra.mxu0 0
    %233 = vmatprep.subr.bf16.mxu0 0
    %234 = vmatpush1.bf16.msra.mxu0 0
    %235 = vmatprep.subr.bf16.mxu0 0
    %236 = vmatpush1.bf16.msra.mxu0 0
    %237 = vmatprep.subr.bf16.mxu0 0
    %238 = vmatpush1.bf16.msra.mxu0 0
    %239 = vmatprep.subr.bf16.mxu0 0
    %240 = vmatpush1.bf16.msra.mxu0 0
    %241 = vmatprep.mubr.bf16.mxu0 0
    %242 = vmatmul.mubr.bf16.gmra.mrb[0].mxu0 %v207
    %v243 = vpop.f32.mrb[0].mxu0
    %v244 = vadd.f32 0.0, %v243
    %v245 = vpop.f32.mrb[0].mxu0
    %v246 = vpop.f32.mrb[0].mxu0
    %v247 = vpop.f32.mrb[0].mxu0
    %248 = vdwg.mxu0
    %v250 = vrot.slane %v244, 1
    %v253 = vadd.f32 %v198, %v244
    %v254 = vadd.f32 %v199, %v250
    %v255 = vxor.u32 %v253, 2147483648
    %v256 = vxor.u32 %v254, 2147483648
    %v257 = vmul.f32 %v255, 1.442695
    %v258 = vpow.pop %v257
    %v259 = vmul.f32 %v256, 1.442695
    %v260 = vpow.pop %v259
    %v261 = vadd.f32 %v258, 1.0
    %v262 = vadd.f32 %v260, 1.0
    %v263 = vrcp.pop %v261
    %v264 = vmul.f32 1.0, %v263
    %v265 = vrcp.pop %v262
    %v266 = vmul.f32 1.0, %v265
    %v267 = vtanh.pop %v253
    %v268 = vtanh.pop %v254
    %v269 = vmul.f32 %v264, %v161
    %v270 = vmul.f32 %v266, %v162
    %273 = vrot.lane.b32.xlu0 %v267, 32
    %v274 = vpop.permute.xlu0 %273
    %275 = vrot.lane.b32.xlu0 %v268, 32
    %v276 = vpop.permute.xlu0 %275
    %v279 = vmul.f32 %v264, %v274
    %v280 = vmul.f32 %v266, %v276
    %283 = vrot.lane.b32.xlu0 %v279, 32
    %v284 = vpop.permute.xlu0 %283
    %285 = vrot.lane.b32.xlu0 %v280, 32
    %v286 = vpop.permute.xlu0 %285
    %v289 = vadd.f32 %v269, %v284
    %v290 = vadd.f32 %v270, %v286
    %v291 = vtanh.pop %v289
    %v292 = vtanh.pop %v290
    %295 = vrot.lane.b32.xlu0 %v291, 32
    %v296 = vpop.permute.xlu0 %295
    %297 = vrot.lane.b32.xlu0 %v292, 32
    %v298 = vpop.permute.xlu0 %297
    %v301 = vmul.f32 %v264, %v296
    %v302 = vmul.f32 %v266, %v298
    %v303 = vpack.c.bf16 %v301, %v301
    %v304 = vpack.c.bf16 %v302, %v302
    %v307 = vunpack.c.l.b16 %v303
    %v308 = vunpack.c.l.b16 %v304
    %v309 = vpack.c.b16 %v307, %v307
    %v310 = vpack.c.b16 %v308, %v308
    %v312 = vshll.u32 %v309, 16
    %v315 = vshll.u32 %v310, 16
    %317 = vrot.lane.b32.xlu0 %v312, 64
    %v318 = vpop.permute.xlu0 %317
    %319 = vrot.lane.b32.xlu0 %v315, 64
    %v320 = vpop.permute.xlu0 %319
    %vm323 = vsmask.f32 7938
    %vm324 = vmand %vm189, %vm323
    %v325 = vld [vmem:[#allocation9] sm:$0x1]
    %v326 = vsel %vm324, %v318, %v325
    %327 = vst [vmem:[#allocation9] sm:$0x1] %v326
    %v328 = vld [vmem:[#allocation9 + $0x4] sm:$0x1]
    %v329 = vsel %vm324, %v320, %v328
    %330 = vst [vmem:[#allocation9 + $0x4] sm:$0x1] %v329
    %v331 = vld [vmem:[#allocation4 + $0x2] sm:$0x1]
    %v332 = vld [vmem:[#allocation4 + $0xa] sm:$0x1]
    %v333 = vrot.slane %v308, 7
    %v334 = vsel %vm201, %v333, %v307
    %v335 = vpack.c.b16 %v334, %v334
    %336 = vrot.lane.b32.xlu0 %v335, 64
    %v337 = vpop.permute.xlu0 %336
    %v339 = vsel %vm69, %v337, 0
    %341 = vmatprep.subr.bf16.mxu0 0
    %342 = vmatpush1.bf16.msra.mxu0 %v65
    %343 = vmatprep.subr.bf16.mxu0 0
    %344 = vmatpush1.bf16.msra.mxu0 %v66
    %345 = vmatprep.subr.bf16.mxu0 0
    %346 = vmatpush1.bf16.msra.mxu0 0
    %347 = vmatprep.subr.bf16.mxu0 0
    %348 = vmatpush1.bf16.msra.mxu0 0
    %349 = vmatprep.subr.bf16.mxu0 0
    %350 = vmatpush1.bf16.msra.mxu0 0
    %351 = vmatprep.subr.bf16.mxu0 0
    %352 = vmatpush1.bf16.msra.mxu0 0
    %353 = vmatprep.subr.bf16.mxu0 0
    %354 = vmatpush1.bf16.msra.mxu0 0
    %355 = vmatprep.subr.bf16.mxu0 0
    %356 = vmatpush1.bf16.msra.mxu0 0
    %357 = vmatprep.subr.bf16.mxu0 0
    %358 = vmatpush1.bf16.msra.mxu0 0
    %359 = vmatprep.subr.bf16.mxu0 0
    %360 = vmatpush1.bf16.msra.mxu0 0
    %361 = vmatprep.subr.bf16.mxu0 0
    %362 = vmatpush1.bf16.msra.mxu0 0
    %363 = vmatprep.subr.bf16.mxu0 0
    %364 = vmatpush1.bf16.msra.mxu0 0
    %365 = vmatprep.subr.bf16.mxu0 0
    %366 = vmatpush1.bf16.msra.mxu0 0
    %367 = vmatprep.subr.bf16.mxu0 0
    %368 = vmatpush1.bf16.msra.mxu0 0
    %369 = vmatprep.subr.bf16.mxu0 0
    %370 = vmatpush1.bf16.msra.mxu0 0
    %371 = vmatprep.subr.bf16.mxu0 0
    %372 = vmatpush1.bf16.msra.mxu0 0
    %373 = vmatprep.mubr.bf16.mxu0 0
    %374 = vmatmul.mubr.bf16.gmra.mrb[0].mxu0 %v339
    %v375 = vpop.f32.mrb[0].mxu0
    %v376 = vadd.f32 0.0, %v375
    %v377 = vpop.f32.mrb[0].mxu0
    %v378 = vpop.f32.mrb[0].mxu0
    %v379 = vpop.f32.mrb[0].mxu0
    %380 = vdwg.mxu0
    %v382 = vrot.slane %v376, 1
    %v385 = vadd.f32 %v331, %v376
    %v386 = vadd.f32 %v332, %v382
    %v387 = vxor.u32 %v385, 2147483648
    %v388 = vxor.u32 %v386, 2147483648
    %v389 = vmul.f32 %v387, 1.442695
    %v390 = vpow.pop %v389
    %v391 = vmul.f32 %v388, 1.442695
    %v392 = vpow.pop %v391
    %v393 = vadd.f32 %v390, 1.0
    %v394 = vadd.f32 %v392, 1.0
    %v395 = vrcp.pop %v393
    %v396 = vmul.f32 1.0, %v395
    %v397 = vrcp.pop %v394
    %v398 = vmul.f32 1.0, %v397
    %v399 = vtanh.pop %v385
    %v400 = vtanh.pop %v386
    %v401 = vmul.f32 %v396, %v289
    %v402 = vmul.f32 %v398, %v290
    %405 = vrot.lane.b32.xlu0 %v399, 32
    %v406 = vpop.permute.xlu0 %405
    %407 = vrot.lane.b32.xlu0 %v400, 32
    %v408 = vpop.permute.xlu0 %407
    %v411 = vmul.f32 %v396, %v406
    %v412 = vmul.f32 %v398, %v408
    %415 = vrot.lane.b32.xlu0 %v411, 32
    %v416 = vpop.permute.xlu0 %415
    %417 = vrot.lane.b32.xlu0 %v412, 32
    %v418 = vpop.permute.xlu0 %417
    %v421 = vadd.f32 %v401, %v416
    %v422 = vadd.f32 %v402, %v418
    %v423 = vtanh.pop %v421
    %v424 = vtanh.pop %v422
    %427 = vrot.lane.b32.xlu0 %v423, 32
    %v428 = vpop.permute.xlu0 %427
    %429 = vrot.lane.b32.xlu0 %v424, 32
    %v430 = vpop.permute.xlu0 %429
    %v433 = vmul.f32 %v396, %v428
    %v434 = vmul.f32 %v398, %v430
    %v435 = vpack.c.bf16 %v433, %v433
    %v436 = vpack.c.bf16 %v434, %v434
    %v439 = vunpack.c.l.b16 %v435
    %v440 = vunpack.c.l.b16 %v436
    %v441 = vpack.c.b16 %v439, %v439
    %v442 = vpack.c.b16 %v440, %v440
    %v443 = vrot.slane %v441, 7
    %v444 = vrot.slane %v442, 7
    %445 = vrot.lane.b32.xlu0 %v443, 64
    %v446 = vpop.permute.xlu0 %445
    %447 = vrot.lane.b32.xlu0 %v444, 64
    %v448 = vpop.permute.xlu0 %447
    %vm451 = vcmask 254977
    %vm452 = vsmask.f32 1280
    %vm453 = vmand %vm451, %vm452
    %v454 = vld [vmem:[#allocation9] sm:$0x2]
    %v455 = vsel %vm453, %v446, %v454
    %456 = vst [vmem:[#allocation9] sm:$0x2] %v455
    %v457 = vld [vmem:[#allocation9 + $0x4] sm:$0x2]
    %v458 = vsel %vm453, %v448, %v457
    %459 = vst [vmem:[#allocation9 + $0x4] sm:$0x2] %v458
    %v460 = vld [vmem:[#allocation4 + $0x3] sm:$0x1]
    %v461 = vld [vmem:[#allocation4 + $0xb] sm:$0x1]
    %v462 = vrot.slane %v440, 7
    %v463 = vsel %vm201, %v462, %v439
    %v464 = vpack.c.b16 %v463, %v463
    %465 = vrot.lane.b32.xlu0 %v464, 64
    %v466 = vpop.permute.xlu0 %465
    %v468 = vsel %vm69, %v466, 0
    %470 = vmatprep.subr.bf16.mxu0 0
    %471 = vmatpush1.bf16.msra.mxu0 %v65
    %472 = vmatprep.subr.bf16.mxu0 0
    %473 = vmatpush1.bf16.msra.mxu0 %v66
    %474 = vmatprep.subr.bf16.mxu0 0
    %475 = vmatpush1.bf16.msra.mxu0 0
    %476 = vmatprep.subr.bf16.mxu0 0
    %477 = vmatpush1.bf16.msra.mxu0 0
    %478 = vmatprep.subr.bf16.mxu0 0
    %479 = vmatpush1.bf16.msra.mxu0 0
    %480 = vmatprep.subr.bf16.mxu0 0
    %481 = vmatpush1.bf16.msra.mxu0 0
    %482 = vmatprep.subr.bf16.mxu0 0
    %483 = vmatpush1.bf16.msra.mxu0 0
    %484 = vmatprep.subr.bf16.mxu0 0
    %485 = vmatpush1.bf16.msra.mxu0 0
    %486 = vmatprep.subr.bf16.mxu0 0
    %487 = vmatpush1.bf16.msra.mxu0 0
    %488 = vmatprep.subr.bf16.mxu0 0
    %489 = vmatpush1.bf16.msra.mxu0 0
    %490 = vmatprep.subr.bf16.mxu0 0
    %491 = vmatpush1.bf16.msra.mxu0 0
    %492 = vmatprep.subr.bf16.mxu0 0
    %493 = vmatpush1.bf16.msra.mxu0 0
    %494 = vmatprep.subr.bf16.mxu0 0
    %495 = vmatpush1.bf16.msra.mxu0 0
    %496 = vmatprep.subr.bf16.mxu0 0
    %497 = vmatpush1.bf16.msra.mxu0 0
    %498 = vmatprep.subr.bf16.mxu0 0
    %499 = vmatpush1.bf16.msra.mxu0 0
    %500 = vmatprep.subr.bf16.mxu0 0
    %501 = vmatpush1.bf16.msra.mxu0 0
    %502 = vmatprep.mubr.bf16.mxu0 0
    %503 = vmatmul.mubr.bf16.gmra.mrb[0].mxu0 %v468
    %v504 = vpop.f32.mrb[0].mxu0
    %v505 = vadd.f32 0.0, %v504
    %v506 = vpop.f32.mrb[0].mxu0
    %v507 = vpop.f32.mrb[0].mxu0
    %v508 = vpop.f32.mrb[0].mxu0
    %509 = vdwg.mxu0
    %v511 = vrot.slane %v505, 1
    %v514 = vadd.f32 %v460, %v505
    %v515 = vadd.f32 %v461, %v511
    %v516 = vxor.u32 %v514, 2147483648
    %v517 = vxor.u32 %v515, 2147483648
    %v518 = vmul.f32 %v516, 1.442695
    %v519 = vpow.pop %v518
    %v520 = vmul.f32 %v517, 1.442695
    %v521 = vpow.pop %v520
    %v522 = vadd.f32 %v519, 1.0
    %v523 = vadd.f32 %v521, 1.0
    %v524 = vrcp.pop %v522
    %v525 = vmul.f32 1.0, %v524
    %v526 = vrcp.pop %v523
    %v527 = vmul.f32 1.0, %v526
    %v528 = vtanh.pop %v514
    %v529 = vtanh.pop %v515
    %v530 = vmul.f32 %v525, %v421
    %v531 = vmul.f32 %v527, %v422
    %534 = vrot.lane.b32.xlu0 %v528, 32
    %v535 = vpop.permute.xlu0 %534
    %536 = vrot.lane.b32.xlu0 %v529, 32
    %v537 = vpop.permute.xlu0 %536
    %v540 = vmul.f32 %v525, %v535
    %v541 = vmul.f32 %v527, %v537
    %544 = vrot.lane.b32.xlu0 %v540, 32
    %v545 = vpop.permute.xlu0 %544
    %546 = vrot.lane.b32.xlu0 %v541, 32
    %v547 = vpop.permute.xlu0 %546
    %v550 = vadd.f32 %v530, %v545
    %v551 = vadd.f32 %v531, %v547
    %v552 = vtanh.pop %v550
    %v553 = vtanh.pop %v551
    %556 = vrot.lane.b32.xlu0 %v552, 32
    %v557 = vpop.permute.xlu0 %556
    %558 = vrot.lane.b32.xlu0 %v553, 32
    %v559 = vpop.permute.xlu0 %558
    %v562 = vmul.f32 %v525, %v557
    %v563 = vmul.f32 %v527, %v559
    %v564 = vpack.c.bf16 %v562, %v562
    %v565 = vpack.c.bf16 %v563, %v563
    %v568 = vunpack.c.l.b16 %v564
    %v569 = vunpack.c.l.b16 %v565
    %v570 = vpack.c.b16 %v568, %v568
    %v571 = vpack.c.b16 %v569, %v569
    %v573 = vshll.u32 %v570, 16
    %v575 = vrot.slane %v573, 7
    %v577 = vshll.u32 %v571, 16
    %v579 = vrot.slane %v577, 7
    %580 = vrot.lane.b32.xlu0 %v575, 64
    %v581 = vpop.permute.xlu0 %580
    %582 = vrot.lane.b32.xlu0 %v579, 64
    %v583 = vpop.permute.xlu0 %582
    %vm586 = vsmask.f32 7942
    %vm587 = vmand %vm451, %vm586
    %v588 = vld [vmem:[#allocation9] sm:$0x2]
    %v589 = vsel %vm587, %v581, %v588
    %590 = vst [vmem:[#allocation9] sm:$0x2] %v589
    %v591 = vld [vmem:[#allocation9 + $0x4] sm:$0x2]
    %v592 = vsel %vm587, %v583, %v591
    %593 = vst [vmem:[#allocation9 + $0x4] sm:$0x2] %v592
    %v594 = vld [vmem:[#allocation4 + $0x4] sm:$0x1]
    %v595 = vld [vmem:[#allocation4 + $0xc] sm:$0x1]
    %v596 = vrot.slane %v569, 7
    %v597 = vsel %vm201, %v596, %v568
    %v598 = vpack.c.b16 %v597, %v597
    %599 = vrot.lane.b32.xlu0 %v598, 64
    %v600 = vpop.permute.xlu0 %599
    %v602 = vsel %vm69, %v600, 0
    %604 = vmatprep.subr.bf16.mxu0 0
    %605 = vmatpush1.bf16.msra.mxu0 %v65
    %606 = vmatprep.subr.bf16.mxu0 0
    %607 = vmatpush1.bf16.msra.mxu0 %v66
    %608 = vmatprep.subr.bf16.mxu0 0
    %609 = vmatpush1.bf16.msra.mxu0 0
    %610 = vmatprep.subr.bf16.mxu0 0
    %611 = vmatpush1.bf16.msra.mxu0 0
    %612 = vmatprep.subr.bf16.mxu0 0
    %613 = vmatpush1.bf16.msra.mxu0 0
    %614 = vmatprep.subr.bf16.mxu0 0
    %615 = vmatpush1.bf16.msra.mxu0 0
    %616 = vmatprep.subr.bf16.mxu0 0
    %617 = vmatpush1.bf16.msra.mxu0 0
    %618 = vmatprep.subr.bf16.mxu0 0
    %619 = vmatpush1.bf16.msra.mxu0 0
    %620 = vmatprep.subr.bf16.mxu0 0
    %621 = vmatpush1.bf16.msra.mxu0 0
    %622 = vmatprep.subr.bf16.mxu0 0
    %623 = vmatpush1.bf16.msra.mxu0 0
    %624 = vmatprep.subr.bf16.mxu0 0
    %625 = vmatpush1.bf16.msra.mxu0 0
    %626 = vmatprep.subr.bf16.mxu0 0
    %627 = vmatpush1.bf16.msra.mxu0 0
    %628 = vmatprep.subr.bf16.mxu0 0
    %629 = vmatpush1.bf16.msra.mxu0 0
    %630 = vmatprep.subr.bf16.mxu0 0
    %631 = vmatpush1.bf16.msra.mxu0 0
    %632 = vmatprep.subr.bf16.mxu0 0
    %633 = vmatpush1.bf16.msra.mxu0 0
    %634 = vmatprep.subr.bf16.mxu0 0
    %635 = vmatpush1.bf16.msra.mxu0 0
    %636 = vmatprep.mubr.bf16.mxu0 0
    %637 = vmatmul.mubr.bf16.gmra.mrb[0].mxu0 %v602
    %v638 = vpop.f32.mrb[0].mxu0
    %v639 = vadd.f32 0.0, %v638
    %v640 = vpop.f32.mrb[0].mxu0
    %v641 = vpop.f32.mrb[0].mxu0
    %v642 = vpop.f32.mrb[0].mxu0
    %643 = vdwg.mxu0
    %v645 = vrot.slane %v639, 1
    %v648 = vadd.f32 %v594, %v639
    %v649 = vadd.f32 %v595, %v645
    %v650 = vxor.u32 %v648, 2147483648
    %v651 = vxor.u32 %v649, 2147483648
    %v652 = vmul.f32 %v650, 1.442695
    %v653 = vpow.pop %v652
    %v654 = vmul.f32 %v651, 1.442695
    %v655 = vpow.pop %v654
    %v656 = vadd.f32 %v653, 1.0
    %v657 = vadd.f32 %v655, 1.0
    %v658 = vrcp.pop %v656
    %v659 = vmul.f32 1.0, %v658
    %v660 = vrcp.pop %v657
    %v661 = vmul.f32 1.0, %v660
    %v662 = vtanh.pop %v648
    %v663 = vtanh.pop %v649
    %v664 = vmul.f32 %v659, %v550
    %v665 = vmul.f32 %v661, %v551
    %668 = vrot.lane.b32.xlu0 %v662, 32
    %v669 = vpop.permute.xlu0 %668
    %670 = vrot.lane.b32.xlu0 %v663, 32
    %v671 = vpop.permute.xlu0 %670
    %v674 = vmul.f32 %v659, %v669
    %v675 = vmul.f32 %v661, %v671
    %678 = vrot.lane.b32.xlu0 %v674, 32
    %v679 = vpop.permute.xlu0 %678
    %680 = vrot.lane.b32.xlu0 %v675, 32
    %v681 = vpop.permute.xlu0 %680
    %v684 = vadd.f32 %v664, %v679
    %v685 = vadd.f32 %v665, %v681
    %v686 = vtanh.pop %v684
    %v687 = vtanh.pop %v685
    %690 = vrot.lane.b32.xlu0 %v686, 32
    %v691 = vpop.permute.xlu0 %690
    %692 = vrot.lane.b32.xlu0 %v687, 32
    %v693 = vpop.permute.xlu0 %692
    %v696 = vmul.f32 %v659, %v691
    %v697 = vmul.f32 %v661, %v693
    %v698 = vpack.c.bf16 %v696, %v696
    %v699 = vpack.c.bf16 %v697, %v697
    %v702 = vunpack.c.l.b16 %v698
    %v703 = vunpack.c.l.b16 %v699
    %v704 = vpack.c.b16 %v702, %v702
    %v705 = vpack.c.b16 %v703, %v703
    %v706 = vrot.slane %v704, 6
    %v707 = vrot.slane %v705, 6
    %708 = vrot.lane.b32.xlu0 %v706, 64
    %v709 = vpop.permute.xlu0 %708
    %710 = vrot.lane.b32.xlu0 %v707, 64
    %v711 = vpop.permute.xlu0 %710
    %vm714 = vcmask 256002
    %vm715 = vsmask.f32 2304
    %vm716 = vmand %vm714, %vm715
    %v717 = vld [vmem:[#allocation9] sm:$0x4]
    %v718 = vsel %vm716, %v709, %v717
    %719 = vst [vmem:[#allocation9] sm:$0x4] %v718
    %v720 = vld [vmem:[#allocation9 + $0x4] sm:$0x4]
    %v721 = vsel %vm716, %v711, %v720
    %722 = vst [vmem:[#allocation9 + $0x4] sm:$0x4] %v721
    %v723 = vld [vmem:[#allocation4 + $0x5] sm:$0x1]
    %v724 = vld [vmem:[#allocation4 + $0xd] sm:$0x1]
    %v725 = vrot.slane %v703, 7
    %v726 = vsel %vm201, %v725, %v702
    %v727 = vpack.c.b16 %v726, %v726
    %728 = vrot.lane.b32.xlu0 %v727, 64
    %v729 = vpop.permute.xlu0 %728
    %v731 = vsel %vm69, %v729, 0
    %733 = vmatprep.subr.bf16.mxu0 0
    %734 = vmatpush1.bf16.msra.mxu0 %v65
    %735 = vmatprep.subr.bf16.mxu0 0
    %736 = vmatpush1.bf16.msra.mxu0 %v66
    %737 = vmatprep.subr.bf16.mxu0 0
    %738 = vmatpush1.bf16.msra.mxu0 0
    %739 = vmatprep.subr.bf16.mxu0 0
    %740 = vmatpush1.bf16.msra.mxu0 0
    %741 = vmatprep.subr.bf16.mxu0 0
    %742 = vmatpush1.bf16.msra.mxu0 0
    %743 = vmatprep.subr.bf16.mxu0 0
    %744 = vmatpush1.bf16.msra.mxu0 0
    %745 = vmatprep.subr.bf16.mxu0 0
    %746 = vmatpush1.bf16.msra.mxu0 0
    %747 = vmatprep.subr.bf16.mxu0 0
    %748 = vmatpush1.bf16.msra.mxu0 0
    %749 = vmatprep.subr.bf16.mxu0 0
    %750 = vmatpush1.bf16.msra.mxu0 0
    %751 = vmatprep.subr.bf16.mxu0 0
    %752 = vmatpush1.bf16.msra.mxu0 0
    %753 = vmatprep.subr.bf16.mxu0 0
    %754 = vmatpush1.bf16.msra.mxu0 0
    %755 = vmatprep.subr.bf16.mxu0 0
    %756 = vmatpush1.bf16.msra.mxu0 0
    %757 = vmatprep.subr.bf16.mxu0 0
    %758 = vmatpush1.bf16.msra.mxu0 0
    %759 = vmatprep.subr.bf16.mxu0 0
    %760 = vmatpush1.bf16.msra.mxu0 0
    %761 = vmatprep.subr.bf16.mxu0 0
    %762 = vmatpush1.bf16.msra.mxu0 0
    %763 = vmatprep.subr.bf16.mxu0 0
    %764 = vmatpush1.bf16.msra.mxu0 0
    %765 = vmatprep.mubr.bf16.mxu0 0
    %766 = vmatmul.mubr.bf16.gmra.mrb[0].mxu0 %v731
    %v767 = vpop.f32.mrb[0].mxu0
    %v768 = vadd.f32 0.0, %v767
    %v769 = vpop.f32.mrb[0].mxu0
    %v770 = vpop.f32.mrb[0].mxu0
    %v771 = vpop.f32.mrb[0].mxu0
    %772 = vdwg.mxu0
    %v774 = vrot.slane %v768, 1
    %v777 = vadd.f32 %v723, %v768
    %v778 = vadd.f32 %v724, %v774
    %v779 = vxor.u32 %v777, 2147483648
    %v780 = vxor.u32 %v778, 2147483648
    %v781 = vmul.f32 %v779, 1.442695
    %v782 = vpow.pop %v781
    %v783 = vmul.f32 %v780, 1.442695
    %v784 = vpow.pop %v783
    %v785 = vadd.f32 %v782, 1.0
    %v786 = vadd.f32 %v784, 1.0
    %v787 = vrcp.pop %v785
    %v788 = vmul.f32 1.0, %v787
    %v789 = vrcp.pop %v786
    %v790 = vmul.f32 1.0, %v789
    %v791 = vtanh.pop %v777
    %v792 = vtanh.pop %v778
    %v793 = vmul.f32 %v788, %v684
    %v794 = vmul.f32 %v790, %v685
    %797 = vrot.lane.b32.xlu0 %v791, 32
    %v798 = vpop.permute.xlu0 %797
    %799 = vrot.lane.b32.xlu0 %v792, 32
    %v800 = vpop.permute.xlu0 %799
    %v803 = vmul.f32 %v788, %v798
    %v804 = vmul.f32 %v790, %v800
    %807 = vrot.lane.b32.xlu0 %v803, 32
    %v808 = vpop.permute.xlu0 %807
    %809 = vrot.lane.b32.xlu0 %v804, 32
    %v810 = vpop.permute.xlu0 %809
    %v813 = vadd.f32 %v793, %v808
    %v814 = vadd.f32 %v794, %v810
    %v815 = vtanh.pop %v813
    %v816 = vtanh.pop %v814
    %819 = vrot.lane.b32.xlu0 %v815, 32
    %v820 = vpop.permute.xlu0 %819
    %821 = vrot.lane.b32.xlu0 %v816, 32
    %v822 = vpop.permute.xlu0 %821
    %v825 = vmul.f32 %v788, %v820
    %v826 = vmul.f32 %v790, %v822
    %v827 = vpack.c.bf16 %v825, %v825
    %v828 = vpack.c.bf16 %v826, %v826
    %v831 = vunpack.c.l.b16 %v827
    %v832 = vunpack.c.l.b16 %v828
    %v833 = vpack.c.b16 %v831, %v831
    %v834 = vpack.c.b16 %v832, %v832
    %v836 = vshll.u32 %v833, 16
    %v838 = vrot.slane %v836, 6
    %v840 = vshll.u32 %v834, 16
    %v842 = vrot.slane %v840, 6
    %843 = vrot.lane.b32.xlu0 %v838, 64
    %v844 = vpop.permute.xlu0 %843
    %845 = vrot.lane.b32.xlu0 %v842, 64
    %v846 = vpop.permute.xlu0 %845
    %vm849 = vsmask.f32 7946
    %vm850 = vmand %vm714, %vm849
    %v851 = vld [vmem:[#allocation9] sm:$0x4]
    %v852 = vsel %vm850, %v844, %v851
    %853 = vst [vmem:[#allocation9] sm:$0x4] %v852
    %v854 = vld [vmem:[#allocation9 + $0x4] sm:$0x4]
    %v855 = vsel %vm850, %v846, %v854
    %856 = vst [vmem:[#allocation9 + $0x4] sm:$0x4] %v855
    %v857 = vld [vmem:[#allocation4 + $0x6] sm:$0x1]
    %v858 = vld [vmem:[#allocation4 + $0xe] sm:$0x1]
    %v859 = vrot.slane %v832, 7
    %v860 = vsel %vm201, %v859, %v831
    %v861 = vpack.c.b16 %v860, %v860
    %862 = vrot.lane.b32.xlu0 %v861, 64
    %v863 = vpop.permute.xlu0 %862
    %v865 = vsel %vm69, %v863, 0
    %867 = vmatprep.subr.bf16.mxu0 0
    %868 = vmatpush1.bf16.msra.mxu0 %v65
    %869 = vmatprep.subr.bf16.mxu0 0
    %870 = vmatpush1.bf16.msra.mxu0 %v66
    %871 = vmatprep.subr.bf16.mxu0 0
    %872 = vmatpush1.bf16.msra.mxu0 0
    %873 = vmatprep.subr.bf16.mxu0 0
    %874 = vmatpush1.bf16.msra.mxu0 0
    %875 = vmatprep.subr.bf16.mxu0 0
    %876 = vmatpush1.bf16.msra.mxu0 0
    %877 = vmatprep.subr.bf16.mxu0 0
    %878 = vmatpush1.bf16.msra.mxu0 0
    %879 = vmatprep.subr.bf16.mxu0 0
    %880 = vmatpush1.bf16.msra.mxu0 0
    %881 = vmatprep.subr.bf16.mxu0 0
    %882 = vmatpush1.bf16.msra.mxu0 0
    %883 = vmatprep.subr.bf16.mxu0 0
    %884 = vmatpush1.bf16.msra.mxu0 0
    %885 = vmatprep.subr.bf16.mxu0 0
    %886 = vmatpush1.bf16.msra.mxu0 0
    %887 = vmatprep.subr.bf16.mxu0 0
    %888 = vmatpush1.bf16.msra.mxu0 0
    %889 = vmatprep.subr.bf16.mxu0 0
    %890 = vmatpush1.bf16.msra.mxu0 0
    %891 = vmatprep.subr.bf16.mxu0 0
    %892 = vmatpush1.bf16.msra.mxu0 0
    %893 = vmatprep.subr.bf16.mxu0 0
    %894 = vmatpush1.bf16.msra.mxu0 0
    %895 = vmatprep.subr.bf16.mxu0 0
    %896 = vmatpush1.bf16.msra.mxu0 0
    %897 = vmatprep.subr.bf16.mxu0 0
    %898 = vmatpush1.bf16.msra.mxu0 0
    %899 = vmatprep.mubr.bf16.mxu0 0
    %900 = vmatmul.mubr.bf16.gmra.mrb[0].mxu0 %v865
    %v901 = vpop.f32.mrb[0].mxu0
    %v902 = vadd.f32 0.0, %v901
    %v903 = vpop.f32.mrb[0].mxu0
    %v904 = vpop.f32.mrb[0].mxu0
    %v905 = vpop.f32.mrb[0].mxu0
    %906 = vdwg.mxu0
    %v908 = vrot.slane %v902, 1
    %v911 = vadd.f32 %v857, %v902
    %v912 = vadd.f32 %v858, %v908
    %v913 = vxor.u32 %v911, 2147483648
    %v914 = vxor.u32 %v912, 2147483648
    %v915 = vmul.f32 %v913, 1.442695
    %v916 = vpow.pop %v915
    %v917 = vmul.f32 %v914, 1.442695
    %v918 = vpow.pop %v917
    %v919 = vadd.f32 %v916, 1.0
    %v920 = vadd.f32 %v918, 1.0
    %v921 = vrcp.pop %v919
    %v922 = vmul.f32 1.0, %v921
    %v923 = vrcp.pop %v920
    %v924 = vmul.f32 1.0, %v923
    %v925 = vtanh.pop %v911
    %v926 = vtanh.pop %v912
    %v927 = vmul.f32 %v922, %v813
    %v928 = vmul.f32 %v924, %v814
    %931 = vrot.lane.b32.xlu0 %v925, 32
    %v932 = vpop.permute.xlu0 %931
    %933 = vrot.lane.b32.xlu0 %v926, 32
    %v934 = vpop.permute.xlu0 %933
    %v937 = vmul.f32 %v922, %v932
    %v938 = vmul.f32 %v924, %v934
    %941 = vrot.lane.b32.xlu0 %v937, 32
    %v942 = vpop.permute.xlu0 %941
    %943 = vrot.lane.b32.xlu0 %v938, 32
    %v944 = vpop.permute.xlu0 %943
    %v947 = vadd.f32 %v927, %v942
    %v948 = vadd.f32 %v928, %v944
    %v949 = vtanh.pop %v947
    %v950 = vtanh.pop %v948
    %953 = vrot.lane.b32.xlu0 %v949, 32
    %v954 = vpop.permute.xlu0 %953
    %955 = vrot.lane.b32.xlu0 %v950, 32
    %v956 = vpop.permute.xlu0 %955
    %v959 = vmul.f32 %v922, %v954
    %v960 = vmul.f32 %v924, %v956
    %v961 = vpack.c.bf16 %v959, %v959
    %v962 = vpack.c.bf16 %v960, %v960
    %v965 = vunpack.c.l.b16 %v961
    %v966 = vunpack.c.l.b16 %v962
    %v967 = vpack.c.b16 %v965, %v965
    %v968 = vpack.c.b16 %v966, %v966
    %v969 = vrot.slane %v967, 5
    %v970 = vrot.slane %v968, 5
    %971 = vrot.lane.b32.xlu0 %v969, 64
    %v972 = vpop.permute.xlu0 %971
    %973 = vrot.lane.b32.xlu0 %v970, 64
    %v974 = vpop.permute.xlu0 %973
    %vm977 = vcmask 257027
    %vm978 = vsmask.f32 3328
    %vm979 = vmand %vm977, %vm978
    %v980 = vld [vmem:[#allocation9] sm:$0x8]
    %v981 = vsel %vm979, %v972, %v980
    %982 = vst [vmem:[#allocation9] sm:$0x8] %v981
    %v983 = vld [vmem:[#allocation9 + $0x4] sm:$0x8]
    %v984 = vsel %vm979, %v974, %v983
    %985 = vst [vmem:[#allocation9 + $0x4] sm:$0x8] %v984
    %v986 = vld [vmem:[#allocation4 + $0x7] sm:$0x1]
    %v987 = vld [vmem:[#allocation4 + $0xf] sm:$0x1]
    %v988 = vrot.slane %v966, 7
    %v989 = vsel %vm201, %v988, %v965
    %v990 = vpack.c.b16 %v989, %v989
    %991 = vrot.lane.b32.xlu0 %v990, 64
    %v992 = vpop.permute.xlu0 %991
    %v994 = vsel %vm69, %v992, 0
    %996 = vmatprep.subr.bf16.mxu0 0
    %997 = vmatpush1.bf16.msra.mxu0 %v65
    %998 = vmatprep.subr.bf16.mxu0 0
    %999 = vmatpush1.bf16.msra.mxu0 %v66
    %1000 = vmatprep.subr.bf16.mxu0 0
    %1001 = vmatpush1.bf16.msra.mxu0 0
    %1002 = vmatprep.subr.bf16.mxu0 0
    %1003 = vmatpush1.bf16.msra.mxu0 0
    %1004 = vmatprep.subr.bf16.mxu0 0
    %1005 = vmatpush1.bf16.msra.mxu0 0
    %1006 = vmatprep.subr.bf16.mxu0 0
    %1007 = vmatpush1.bf16.msra.mxu0 0
    %1008 = vmatprep.subr.bf16.mxu0 0
    %1009 = vmatpush1.bf16.msra.mxu0 0
    %1010 = vmatprep.subr.bf16.mxu0 0
    %1011 = vmatpush1.bf16.msra.mxu0 0
    %1012 = vmatprep.subr.bf16.mxu0 0
    %1013 = vmatpush1.bf16.msra.mxu0 0
    %1014 = vmatprep.subr.bf16.mxu0 0
    %1015 = vmatpush1.bf16.msra.mxu0 0
    %1016 = vmatprep.subr.bf16.mxu0 0
    %1017 = vmatpush1.bf16.msra.mxu0 0
    %1018 = vmatprep.subr.bf16.mxu0 0
    %1019 = vmatpush1.bf16.msra.mxu0 0
    %1020 = vmatprep.subr.bf16.mxu0 0
    %1021 = vmatpush1.bf16.msra.mxu0 0
    %1022 = vmatprep.subr.bf16.mxu0 0
    %1023 = vmatpush1.bf16.msra.mxu0 0
    %1024 = vmatprep.subr.bf16.mxu0 0
    %1025 = vmatpush1.bf16.msra.mxu0 0
    %1026 = vmatprep.subr.bf16.mxu0 0
    %1027 = vmatpush1.bf16.msra.mxu0 0
    %1028 = vmatprep.mubr.bf16.mxu0 0
    %1029 = vmatmul.mubr.bf16.gmra.mrb[0].mxu0 %v994
    %v1030 = vpop.f32.mrb[0].mxu0
    %v1031 = vadd.f32 0.0, %v1030
    %v1032 = vpop.f32.mrb[0].mxu0
    %v1033 = vpop.f32.mrb[0].mxu0
    %v1034 = vpop.f32.mrb[0].mxu0
    %1035 = vdwg.mxu0
    %v1037 = vrot.slane %v1031, 1
    %v1040 = vadd.f32 %v986, %v1031
    %v1041 = vadd.f32 %v987, %v1037
    %v1042 = vxor.u32 %v1040, 2147483648
    %v1043 = vxor.u32 %v1041, 2147483648
    %v1044 = vmul.f32 %v1042, 1.442695
    %v1045 = vpow.pop %v1044
    %v1046 = vmul.f32 %v1043, 1.442695
    %v1047 = vpow.pop %v1046
    %v1048 = vadd.f32 %v1045, 1.0
    %v1049 = vadd.f32 %v1047, 1.0
    %v1050 = vrcp.pop %v1048
    %v1051 = vmul.f32 1.0, %v1050
    %v1052 = vrcp.pop %v1049
    %v1053 = vmul.f32 1.0, %v1052
    %v1054 = vtanh.pop %v1040
    %v1055 = vtanh.pop %v1041
    %v1056 = vmul.f32 %v1051, %v947
    %v1057 = vmul.f32 %v1053, %v948
    %1060 = vrot.lane.b32.xlu0 %v1054, 32
    %v1061 = vpop.permute.xlu0 %1060
    %1062 = vrot.lane.b32.xlu0 %v1055, 32
    %v1063 = vpop.permute.xlu0 %1062
    %v1066 = vmul.f32 %v1051, %v1061
    %v1067 = vmul.f32 %v1053, %v1063
    %1070 = vrot.lane.b32.xlu0 %v1066, 32
    %v1071 = vpop.permute.xlu0 %1070
    %1072 = vrot.lane.b32.xlu0 %v1067, 32
    %v1073 = vpop.permute.xlu0 %1072
    %v1076 = vadd.f32 %v1056, %v1071
    %v1077 = vadd.f32 %v1057, %v1073
    %v1078 = vtanh.pop %v1076
    %v1079 = vtanh.pop %v1077
    %1082 = vrot.lane.b32.xlu0 %v1078, 32
    %v1083 = vpop.permute.xlu0 %1082
    %1084 = vrot.lane.b32.xlu0 %v1079, 32
    %v1085 = vpop.permute.xlu0 %1084
    %v1088 = vmul.f32 %v1051, %v1083
    %v1089 = vmul.f32 %v1053, %v1085
    %v1090 = vpack.c.bf16 %v1088, %v1088
    %v1091 = vpack.c.bf16 %v1089, %v1089
    %v1094 = vunpack.c.l.b16 %v1090
    %v1095 = vunpack.c.l.b16 %v1091
    %v1096 = vpack.c.b16 %v1094, %v1094
    %v1097 = vpack.c.b16 %v1095, %v1095
    %v1099 = vshll.u32 %v1096, 16
    %v1101 = vrot.slane %v1099, 5
    %v1103 = vshll.u32 %v1097, 16
    %v1105 = vrot.slane %v1103, 5
    %1106 = vrot.lane.b32.xlu0 %v1101, 64
    %v1107 = vpop.permute.xlu0 %1106
    %1108 = vrot.lane.b32.xlu0 %v1105, 64
    %v1109 = vpop.permute.xlu0 %1108
    %vm1112 = vsmask.f32 7950
    %vm1113 = vmand %vm977, %vm1112
    %v1114 = vld [vmem:[#allocation9] sm:$0x8]
    %v1115 = vsel %vm1113, %v1107, %v1114
    %1116 = vst [vmem:[#allocation9] sm:$0x8] %v1115
    %v1117 = vld [vmem:[#allocation9 + $0x4] sm:$0x8]
    %v1118 = vsel %vm1113, %v1109, %v1117
    %1119 = vst [vmem:[#allocation9 + $0x4] sm:$0x8] %v1118
    %v1122 = vrot.slane %v1089, 7
    %v1123 = vsel %vm201, %v1122, %v1088
    %1124 = vrot.lane.b32.xlu0 %v1123, 64
    %v1125 = vpop.permute.xlu0 %1124
    %vm1127 = vcmask 254976
    %1128 = vst.msk [vmem:[#allocation2] sm:$0x3] %vm1127, %v1125
    %v1131 = vrot.slane %v1077, 7
    %v1132 = vsel %vm201, %v1131, %v1076
    %1133 = vrot.lane.b32.xlu0 %v1132, 96
    %v1134 = vpop.permute.xlu0 %1133
    %1136 = vst.msk [vmem:[#allocation3] sm:$0x3] %vm1127, %v1134
    // Predicated region
    $region22: #{lstm_forward.6} parent=1 // pred_check
      _
    $region23: #{lstm_forward.6} parent=1 // pred_check_branch
      %1138 = sbr.rel (0) target = $region25
    $region24: #{lstm_forward.6} parent=1 // pred_region
      %s1140 = ssub.s32 128, 128
      %1141 = vsyncadd [#allocation6], %s1140
      %s1142 = sshll.u32 [#allocation9], 4
      %s1143 = int_to_ptr.vmem [resolvable:$true] %s1142
      %1148 = dma.vmem_to_hbm [thread:$0]  %s1143, 128, %s2, [#allocation6], 64, 64, 4
    $region25: #{lstm_forward.6} parent=1 // pred_fallthru
      _
    // Predicated region
    $region26: #{lstm_forward.6} parent=1 // pred_check
      _
    $region27: #{lstm_forward.6} parent=1 // pred_check_branch
      %1150 = sbr.rel (0) target = $region29
    $region28: #{lstm_forward.6} parent=1 // pred_region
      %1151 = dma.done [#allocation6], 128
    $region29: #{lstm_forward.6} parent=1 // pred_fallthru
      _
    %1152 = vsyncpa [#allocation5], 1
    %1153 = vsyncpa [#allocation8], 1
    %1154 = vsyncpa [#allocation6], 1

</llo_original>
